<compile_context>
chip_gen: v5e
topology: v5e:2x2
jax: 0.10.0
libtpu: 0.0.40
codegen_flags: <defaults>
</compile_context>

<pallas_src>
import functools

import jax
import jax.numpy as jnp
from jax import lax
from jax.experimental import pallas as pl
from jax.experimental.pallas import tpu as pltpu

_LANE = 128
_HEAD_BLOCK = 128   # lane-aligned width for the [mean|log_std] head and the u head


def _round_up(x, m):
    return ((x + m - 1) // m) * m


# ----------------------------------------------------------------------------
# Pallas kernel: full VAE forward (one batch tile per grid step)
# ----------------------------------------------------------------------------
def _vae_forward_kernel(
    # batch-tiled activations
    sa_ref,        # (TB, S+A) bf16  -- concatenated [state, action]
    state_ref,     # (TB, S)   bf16
    eps2_ref,      # (TB, 128) f32   -- [ones(L) | eps(L) | zeros]
    # VMEM-resident weights (bf16), hidden dim padded to Hp (multiple of 128)
    w1e_ref,       # (S+A, Hp)
    w2e_ref,       # (Hp, Hp)
    wheads_ref,    # (Hp, 128)  [wm | wls | 0]
    w1d_s_ref,     # (S, Hp)
    w1d_z2_ref,    # (128, Hp)  [w1d_z ; w1d_z ; 0]
    w2d_ref,       # (Hp, Hp)
    w3d_ref,       # (Hp, 128)  [w3d | 0]
    # packed biases (8, Hp) f32: rows = b1e, b2e, [bm|bls|0], b1d, b2d, [b3d|0], 0, 0
    bias_ref,
    # packed lane-dense output slab (TB, 256) f32: [u_full(128) | mean_std(128)]
    out_ref,
    *, max_action: float, latent_dim: int,
):
    f32, bf16 = jnp.float32, jnp.bfloat16
    L = latent_dim
    HB = _HEAD_BLOCK

    sa = sa_ref[...]
    state = state_ref[...]
    eps2 = eps2_ref[...]

    b1e = bias_ref[0:1, :]
    b2e = bias_ref[1:2, :]
    bheads = bias_ref[2:3, 0:HB]
    b1d = bias_ref[3:4, :]
    b2d = bias_ref[4:5, :]
    b3d = bias_ref[5:6, 0:HB]

    # ---------------- encoder: Linear -> ReLU -> Linear -> ReLU --------------
    h1 = jnp.dot(sa, w1e_ref[...], preferred_element_type=f32) + b1e
    h1 = jnp.maximum(h1, 0.0).astype(bf16)
    h2 = jnp.dot(h1, w2e_ref[...], preferred_element_type=f32) + b2e
    h2 = jnp.maximum(h2, 0.0).astype(bf16)

    # ---------------- fused mean / log_std heads (one 128-wide matmul) -------
    ms = jnp.dot(h2, wheads_ref[...], preferred_element_type=f32) + bheads  # (TB,128)
    lane = lax.broadcasted_iota(jnp.int32, ms.shape, 1)
    std_all = jnp.exp(jnp.clip(ms, -4.0, 15.0))
    # [mean | std | 0] -- purely elementwise select, no lane movement.
    mean_std = jnp.where(lane < L, ms, jnp.where(lane < 2 * L, std_all, 0.0))

    # ---------------- reparameterization, folded into the decoder matmul -----
    # mz = [mean | std*eps | 0];  mz @ [w1d_z; w1d_z; 0] == (mean + std*eps) @ w1d_z
    mz = (mean_std * eps2).astype(bf16)

    # ---------------- decoder: Linear->ReLU->Linear->ReLU->Linear->Tanh ------
    d1 = (jnp.dot(state, w1d_s_ref[...], preferred_element_type=f32)
          + jnp.dot(mz, w1d_z2_ref[...], preferred_element_type=f32)
          + b1d)
    d1 = jnp.maximum(d1, 0.0).astype(bf16)
    d2 = jnp.dot(d1, w2d_ref[...], preferred_element_type=f32) + b2d
    d2 = jnp.maximum(d2, 0.0).astype(bf16)
    d3 = jnp.dot(d2, w3d_ref[...], preferred_element_type=f32) + b3d
    u_full = max_action * jnp.tanh(d3)     # padded columns: tanh(0) == 0

    # ---------------- lane-dense packed output slab ---------------------------
    out_ref[:, 0:HB] = u_full.astype(out_ref.dtype)
    out_ref[:, HB:2 * HB] = mean_std.astype(out_ref.dtype)


# ----------------------------------------------------------------------------
# One-time parameter preparation (do NOT call per forward)
# ----------------------------------------------------------------------------
def prepare_vae_params(params, state_dim, action_dim, latent_dim):
    """bf16 cast, hidden-dim padding to a multiple of 128, head fusion,
    decoder-layer-1 split (+ duplicated z weight) and bias packing."""
    S, A, L = int(state_dim), int(action_dim), int(latent_dim)
    H = params["b1e"].shape[-1]
    Hp = _round_up(H, _LANE)
    HB = _HEAD_BLOCK
    # TODO(synk): generalise head/output packing for 2*latent_dim or action_dim > 128.
    assert 2 * L <= HB and A <= HB, "packing assumes 2*latent_dim and action_dim <= 128"
    f32, bf16 = jnp.float32, jnp.bfloat16

    def pad2(w, rows, cols):
        r, c = w.shape
        return jnp.pad(w.astype(f32), ((0, rows - r), (0, cols - c))).astype(bf16)

    def pad1(b, n):
        return jnp.pad(b.astype(f32), (0, n - b.shape[0]))

    w1d = params["w1d"]
    w1d_z = w1d[S:]                                              # (L, H)
    return {
        "w1e": pad2(params["w1e"], S + A, Hp),
        "w2e": pad2(params["w2e"], Hp, Hp),
        "wheads": pad2(jnp.concatenate([params["wm"], params["wls"]], axis=-1), Hp, HB),
        "w1d_s": pad2(w1d[:S], S, Hp),
        "w1d_z2": pad2(jnp.concatenate([w1d_z, w1d_z], axis=0), HB, Hp),
        "w2d": pad2(params["w2d"], Hp, Hp),
        "w3d": pad2(params["w3d"], Hp, HB),
        "bias": jnp.stack([
            pad1(params["b1e"], Hp),
            pad1(params["b2e"], Hp),
            pad1(jnp.concatenate([params["bm"], params["bls"]]), Hp),
            pad1(params["b1d"], Hp),
            pad1(params["b2d"], Hp),
            pad1(params["b3d"], Hp),
            jnp.zeros((Hp,), f32),
            jnp.zeros((Hp,), f32),
        ], axis=0),
    }


# ----------------------------------------------------------------------------
# Wrapper
# ----------------------------------------------------------------------------
def _choose_batch_tile(B, batch_tile=None):
    if B <= 8:
        return B
    if batch_tile is not None:
        tb = min(batch_tile, B)
        if tb >= B:
            return B
        return max(8, (tb // 8) * 8)
    # >= 2 grid steps when possible (v7x megacore), tile capped at 512 rows.
    half = (B + 1) // 2
    return min(512, max(8, (half // 8) * 8))


def vae_forward(state, action, eps, prepared, max_action=1.0, batch_tile=None):
    """Fused VAE forward. Returns (u, mean, std), matching VAE.forward."""
    B, S = state.shape
    _, A = action.shape
    L = eps.shape[-1]
    HB = _HEAD_BLOCK
    f32, bf16 = jnp.float32, jnp.bfloat16

    w1e, w2e, wheads = prepared["w1e"], prepared["w2e"], prepared["wheads"]
    w1d_s, w1d_z2 = prepared["w1d_s"], prepared["w1d_z2"]
    w2d, w3d, bias_pack = prepared["w2d"], prepared["w3d"], prepared["bias"]
    Hp = w2e.shape[0]
    assert w1e.shape[0] == S + A and w1d_s.shape[0] == S
    assert 2 * L <= HB and A <= HB

    tb = _choose_batch_tile(B, batch_tile)
    grid = (pl.cdiv(B, tb),)

    # Per-call activation prep (weights were prepared once, outside).
    sa = jnp.concatenate([state, action], axis=-1).astype(bf16)
    state_bf = state.astype(bf16)
    eps2 = jnp.concatenate(
        [jnp.ones((B, L), f32), eps.astype(f32), jnp.zeros((B, HB - 2 * L), f32)],
        axis=-1)

    def act_spec(width):
        return pl.BlockSpec((tb, width), lambda i: (i, 0))

    kernel = functools.partial(
        _vae_forward_kernel, max_action=float(max_action), latent_dim=int(L))

    # Advisory cost estimate (weights counted once: they stay VMEM-resident).
    flops = 2 * B * ((S + A) * Hp + Hp * Hp + Hp * HB
                     + S * Hp + HB * Hp + Hp * Hp + Hp * HB)
    transcendentals = B * 2 * HB
    weight_bytes = sum(int(a.size) * a.dtype.itemsize
                       for a in (w1e, w2e, wheads, w1d_s, w1d_z2, w2d, w3d, bias_pack))
    bytes_accessed = int(weight_bytes + 2 * (sa.size + state_bf.size)
                         + 4 * eps2.size + 4 * B * 2 * HB)

    # Real VMEM footprint (x2 weights to also cover the double-buffered fallback,
    # double-buffered activation/output tiles, f32 intermediates) with 2x headroom,
    # clamped to [8, 32] MiB -- well under v7x's 64 MiB physical VMEM.
    act_bytes = 2 * (tb * (S + A) + tb * S) + 4 * tb * HB
    out_bytes = 4 * tb * 2 * HB
    interm_bytes = 4 * tb * Hp * 4
    footprint = 2 * weight_bytes + 2 * (act_bytes + out_bytes) + interm_bytes
    vmem_limit = int(min(max(2 * footprint, 8 << 20), 32 << 20))

    def build_call(single_buffer_weights):
        if single_buffer_weights:
            def const_spec(arr):
                return pl.BlockSpec(arr.shape, lambda i: (0, 0),
                                    pipeline_mode=pl.Buffered(buffer_count=1))
        else:
            def const_spec(arr):
                return pl.BlockSpec(arr.shape, lambda i: (0, 0))
        in_specs = [
            act_spec(S + A), act_spec(S), act_spec(HB),
            const_spec(w1e), const_spec(w2e), const_spec(wheads),
            const_spec(w1d_s), const_spec(w1d_z2), const_spec(w2d), const_spec(w3d),
            const_spec(bias_pack),
        ]
        return pl.pallas_call(
            kernel,
            grid=grid,
            in_specs=in_specs,
            out_specs=pl.BlockSpec((tb, 2 * HB), lambda i: (i, 0)),
            out_shape=jax.ShapeDtypeStruct((B, 2 * HB), f32),
            compiler_params=pltpu.CompilerParams(
                dimension_semantics=("parallel",),
                vmem_limit_bytes=vmem_limit),
            cost_estimate=pl.CostEstimate(
                flops=int(flops), transcendentals=int(transcendentals),
                bytes_accessed=bytes_accessed),
        )

    args = (sa, state_bf, eps2, w1e, w2e, wheads, w1d_s, w1d_z2, w2d, w3d, bias_pack)
    try:
        slab = build_call(True)(*args)
    except Exception:
        # TODO(synk): pl.Buffered(1) (single-buffered resident weights) not supported
        # by this jax version -> fall back to default double buffering.
        slab = build_call(False)(*args)

    u = slab[:, 0:A]
    mean = slab[:, HB:HB + L]
    std = slab[:, HB + L:HB + 2 * L]
    return u, mean, std


# ----------------------------------------------------------------------------
# Deterministic parameter init (PyTorch nn.Linear-style uniform(-1/sqrt(fan_in)))
# ----------------------------------------------------------------------------
def init_vae_params(key, state_dim, action_dim, latent_dim, hidden_dim):
    def linear(key, fan_in, fan_out):
        kw, kb = jax.random.split(key)
        bound = 1.0 / jnp.sqrt(fan_in)
        w = jax.random.uniform(kw, (fan_in, fan_out), jnp.float32, -bound, bound)
        b = jax.random.uniform(kb, (fan_out,), jnp.float32, -bound, bound)
        return w, b

    keys = jax.random.split(key, 7)
    params = {}
    params["w1e"], params["b1e"] = linear(keys[0], state_dim + action_dim, hidden_dim)
    params["w2e"], params["b2e"] = linear(keys[1], hidden_dim, hidden_dim)
    params["wm"], params["bm"] = linear(keys[2], hidden_dim, latent_dim)
    params["wls"], params["bls"] = linear(keys[3], hidden_dim, latent_dim)
    params["w1d"], params["b1d"] = linear(keys[4], state_dim + latent_dim, hidden_dim)
    params["w2d"], params["b2d"] = linear(keys[5], hidden_dim, hidden_dim)
    params["w3d"], params["b3d"] = linear(keys[6], hidden_dim, action_dim)
    return params


# ----------------------------------------------------------------------------
# Pure-JAX references
# ----------------------------------------------------------------------------
def vae_forward_ref(state, action, eps, params, max_action=1.0, *, cast_bf16=True):
    """Reference. cast_bf16=True approximates the kernel's bf16-weight / f32-accum
    numerics; cast_bf16=False is the plain f32 math of the PyTorch module."""
    f32, bf16 = jnp.float32, jnp.bfloat16

    def dot(a, w):
        if cast_bf16:
            a, w = a.astype(bf16), w.astype(bf16)
        return jnp.dot(a, w, preferred_element_type=f32)

    x = jnp.concatenate([state, action], axis=-1)
    h = jnp.maximum(dot(x, params["w1e"]) + params["b1e"], 0.0)
    h = jnp.maximum(dot(h, params["w2e"]) + params["b2e"], 0.0)
    mean = dot(h, params["wm"]) + params["bm"]
    log_std = jnp.clip(dot(h, params["wls"]) + params["bls"], -4.0, 15.0)
    std = jnp.exp(log_std)
    z = mean + std * eps
    xd = jnp.concatenate([state, z], axis=-1)
    d = jnp.maximum(dot(xd, params["w1d"]) + params["b1d"], 0.0)
    d = jnp.maximum(dot(d, params["w2d"]) + params["b2d"], 0.0)
    u = max_action * jnp.tanh(dot(d, params["w3d"]) + params["b3d"])
    return u, mean, std


if __name__ == "__main__":
    # Small shapes consistent with the module's forward pass.  hidden_dim is
    # deliberately NOT a multiple of 128 (module default 750 -> 768) to
    # exercise the padding path (120 -> 128 here).
    B = 16
    state_dim = 16
    action_dim = 8
    latent_dim = 2 * action_dim   # latent_dim = 2 * action_dim when None
    hidden_dim = 120
    max_action = 1.0

    key = jax.random.PRNGKey(0)
    k_params, k_state, k_action, k_eps = jax.random.split(key, 4)

    params = init_vae_params(k_params, state_dim, action_dim, latent_dim, hidden_dim)
    prepared = prepare_vae_params(params, state_dim, action_dim, latent_dim)

    state = jax.random.normal(k_state, (B, state_dim), jnp.float32)
    action = jax.random.normal(k_action, (B, action_dim), jnp.float32)
    # Reparameterization noise (torch.randn_like(std)), generated outside the
    # kernel for determinism.
    eps = jax.random.normal(k_eps, (B, latent_dim), jnp.float32)

    # Auto tile choice -> tb=8, 2 grid steps (exercises the batch pipeline /
    # v7x megacore split).
    u, mean, std = vae_forward(state, action, eps, prepared, max_action)
    jax.block_until_ready((u, mean, std))

    # Numerics-matched (bf16 weights, f32 accumulation) reference.
    u_r, m_r, s_r = vae_forward_ref(state, action, eps, params, max_action, cast_bf16=True)
    assert jnp.allclose(mean, m_r, atol=1e-2, rtol=1e-2)
    assert jnp.allclose(std, s_r, atol=1e-2, rtol=1e-2)
    assert jnp.allclose(u, u_r, atol=2e-2, rtol=2e-2)

    # Full-f32 module semantics: loose sanity check (bf16 weight quantization).
    u_f, m_f, s_f = vae_forward_ref(state, action, eps, params, max_action, cast_bf16=False)
    assert jnp.allclose(u, u_f, atol=1e-1, rtol=1e-1)
    assert jnp.allclose(mean, m_f, atol=1e-1, rtol=1e-1)
    assert jnp.allclose(std, s_f, atol=1e-1, rtol=1e-1)

    print("KERNEL_OK")
</pallas_src>

<mosaic_0001>
module attributes {stable_mosaic.version = 11 : i64} {
  func.func @_vae_forward_kernel(%arg0: i32, %arg1: memref<8x24xbf16, #tpu.memory_space<vmem>>, %arg2: memref<8x16xbf16, #tpu.memory_space<vmem>>, %arg3: memref<8x128xf32, #tpu.memory_space<vmem>>, %arg4: memref<24x128xbf16, #tpu.memory_space<vmem>>, %arg5: memref<128x128xbf16, #tpu.memory_space<vmem>>, %arg6: memref<128x128xbf16, #tpu.memory_space<vmem>>, %arg7: memref<16x128xbf16, #tpu.memory_space<vmem>>, %arg8: memref<128x128xbf16, #tpu.memory_space<vmem>>, %arg9: memref<128x128xbf16, #tpu.memory_space<vmem>>, %arg10: memref<128x128xbf16, #tpu.memory_space<vmem>>, %arg11: memref<8x128xf32, #tpu.memory_space<vmem>>, %arg12: memref<8x256xf32, #tpu.memory_space<vmem>>) attributes {dimension_semantics = [#tpu.dimension_semantics<parallel>], iteration_bounds = array<i64: 2>, scalar_prefetch = 0 : i64, scratch_operands = 0 : i64, tpu.core_type = #tpu.core_type<tc>, window_params = [{transform_indices = @transform_0, window_bounds = array<i64: 8, 24>}, {transform_indices = @transform_1, window_bounds = array<i64: 8, 16>}, {transform_indices = @transform_2, window_bounds = array<i64: 8, 128>}, {pipeline_mode = #tpu.pipeline_mode<synchronous>, transform_indices = @transform_3, window_bounds = array<i64: 24, 128>}, {pipeline_mode = #tpu.pipeline_mode<synchronous>, transform_indices = @transform_4, window_bounds = array<i64: 128, 128>}, {pipeline_mode = #tpu.pipeline_mode<synchronous>, transform_indices = @transform_5, window_bounds = array<i64: 128, 128>}, {pipeline_mode = #tpu.pipeline_mode<synchronous>, transform_indices = @transform_6, window_bounds = array<i64: 16, 128>}, {pipeline_mode = #tpu.pipeline_mode<synchronous>, transform_indices = @transform_7, window_bounds = array<i64: 128, 128>}, {pipeline_mode = #tpu.pipeline_mode<synchronous>, transform_indices = @transform_8, window_bounds = array<i64: 128, 128>}, {pipeline_mode = #tpu.pipeline_mode<synchronous>, transform_indices = @transform_9, window_bounds = array<i64: 128, 128>}, {pipeline_mode = #tpu.pipeline_mode<synchronous>, transform_indices = @transform_10, window_bounds = array<i64: 8, 128>}, {transform_indices = @transform_11, window_bounds = array<i64: 8, 256>}]} {
    %c0 = arith.constant 0 : index
    %c0_0 = arith.constant 0 : index
    %0 = vector.load %arg1[%c0, %c0_0] : memref<8x24xbf16, #tpu.memory_space<vmem>>, vector<8x24xbf16>
    %c0_1 = arith.constant 0 : index
    %c0_2 = arith.constant 0 : index
    %1 = vector.load %arg2[%c0_1, %c0_2] : memref<8x16xbf16, #tpu.memory_space<vmem>>, vector<8x16xbf16>
    %c0_3 = arith.constant 0 : index
    %c0_4 = arith.constant 0 : index
    %2 = vector.load %arg3[%c0_3, %c0_4] : memref<8x128xf32, #tpu.memory_space<vmem>>, vector<8x128xf32>
    %c0_5 = arith.constant 0 : index
    %c0_6 = arith.constant 0 : index
    %3 = vector.load %arg11[%c0_5, %c0_6] : memref<8x128xf32, #tpu.memory_space<vmem>>, vector<1x128xf32>
    %c1 = arith.constant 1 : index
    %c0_7 = arith.constant 0 : index
    %4 = vector.load %arg11[%c1, %c0_7] : memref<8x128xf32, #tpu.memory_space<vmem>>, vector<1x128xf32>
    %c2 = arith.constant 2 : index
    %c0_8 = arith.constant 0 : index
    %5 = vector.load %arg11[%c2, %c0_8] : memref<8x128xf32, #tpu.memory_space<vmem>>, vector<1x128xf32>
    %c3 = arith.constant 3 : index
    %c0_9 = arith.constant 0 : index
    %6 = vector.load %arg11[%c3, %c0_9] : memref<8x128xf32, #tpu.memory_space<vmem>>, vector<1x128xf32>
    %c4 = arith.constant 4 : index
    %c0_10 = arith.constant 0 : index
    %7 = vector.load %arg11[%c4, %c0_10] : memref<8x128xf32, #tpu.memory_space<vmem>>, vector<1x128xf32>
    %c5 = arith.constant 5 : index
    %c0_11 = arith.constant 0 : index
    %8 = vector.load %arg11[%c5, %c0_11] : memref<8x128xf32, #tpu.memory_space<vmem>>, vector<1x128xf32>
    %c0_12 = arith.constant 0 : index
    %c0_13 = arith.constant 0 : index
    %9 = vector.load %arg4[%c0_12, %c0_13] : memref<24x128xbf16, #tpu.memory_space<vmem>>, vector<24x128xbf16>
    %cst = arith.constant dense<0.000000e+00> : vector<8x128xf32>
    %10 = tpu.matmul %0, %9, %cst {dimension_numbers = #tpu.dot_dimension_numbers<[1], [0], [0], [1], [0, 0, 1, 1], [], []>} : vector<8x24xbf16>, vector<24x128xbf16>, vector<8x128xf32> -> vector<8x128xf32>
    %11 = vector.broadcast %3 : vector<1x128xf32> to vector<8x128xf32>
    %12 = arith.addf %10, %11 : vector<8x128xf32>
    %cst_14 = arith.constant 0.000000e+00 : f32
    %13 = vector.broadcast %cst_14 : f32 to vector<8x128xf32>
    %14 = arith.maximumf %12, %13 : vector<8x128xf32>
    %15 = arith.truncf %14 : vector<8x128xf32> to vector<8x128xbf16>
    %c0_15 = arith.constant 0 : index
    %c0_16 = arith.constant 0 : index
    %16 = vector.load %arg5[%c0_15, %c0_16] : memref<128x128xbf16, #tpu.memory_space<vmem>>, vector<128x128xbf16>
    %cst_17 = arith.constant dense<0.000000e+00> : vector<8x128xf32>
    %17 = tpu.matmul %15, %16, %cst_17 {dimension_numbers = #tpu.dot_dimension_numbers<[1], [0], [0], [1], [0, 0, 1, 1], [], []>} : vector<8x128xbf16>, vector<128x128xbf16>, vector<8x128xf32> -> vector<8x128xf32>
    %18 = vector.broadcast %4 : vector<1x128xf32> to vector<8x128xf32>
    %19 = arith.addf %17, %18 : vector<8x128xf32>
    %cst_18 = arith.constant 0.000000e+00 : f32
    %20 = vector.broadcast %cst_18 : f32 to vector<8x128xf32>
    %21 = arith.maximumf %19, %20 : vector<8x128xf32>
    %22 = arith.truncf %21 : vector<8x128xf32> to vector<8x128xbf16>
    %c0_19 = arith.constant 0 : index
    %c0_20 = arith.constant 0 : index
    %23 = vector.load %arg6[%c0_19, %c0_20] : memref<128x128xbf16, #tpu.memory_space<vmem>>, vector<128x128xbf16>
    %cst_21 = arith.constant dense<0.000000e+00> : vector<8x128xf32>
    %24 = tpu.matmul %22, %23, %cst_21 {dimension_numbers = #tpu.dot_dimension_numbers<[1], [0], [0], [1], [0, 0, 1, 1], [], []>} : vector<8x128xbf16>, vector<128x128xbf16>, vector<8x128xf32> -> vector<8x128xf32>
    %25 = vector.broadcast %5 : vector<1x128xf32> to vector<8x128xf32>
    %26 = arith.addf %24, %25 : vector<8x128xf32>
    %27 = tpu.iota {dimensions = array<i32: 1>} : vector<8x128xi32>
    %cst_22 = arith.constant -4.000000e+00 : f32
    %cst_23 = arith.constant 1.500000e+01 : f32
    %28 = vector.broadcast %cst_22 : f32 to vector<8x128xf32>
    %29 = arith.maximumf %28, %26 : vector<8x128xf32>
    %30 = vector.broadcast %cst_23 : f32 to vector<8x128xf32>
    %31 = arith.minimumf %30, %29 : vector<8x128xf32>
    %32 = math.exp %31 : vector<8x128xf32>
    %c16_i32 = arith.constant 16 : i32
    %33 = vector.broadcast %c16_i32 : i32 to vector<8x128xi32>
    %34 = arith.cmpi slt, %27, %33 : vector<8x128xi32>
    %c32_i32 = arith.constant 32 : i32
    %35 = vector.broadcast %c32_i32 : i32 to vector<8x128xi32>
    %36 = arith.cmpi slt, %27, %35 : vector<8x128xi32>
    %cst_24 = arith.constant 0.000000e+00 : f32
    %37 = vector.broadcast %cst_24 : f32 to vector<8x128xf32>
    %38 = arith.select %36, %32, %37 : vector<8x128xi1>, vector<8x128xf32>
    %39 = arith.select %34, %26, %38 : vector<8x128xi1>, vector<8x128xf32>
    %40 = arith.mulf %39, %2 : vector<8x128xf32>
    %41 = arith.truncf %40 : vector<8x128xf32> to vector<8x128xbf16>
    %c0_25 = arith.constant 0 : index
    %c0_26 = arith.constant 0 : index
    %42 = vector.load %arg7[%c0_25, %c0_26] : memref<16x128xbf16, #tpu.memory_space<vmem>>, vector<16x128xbf16>
    %cst_27 = arith.constant dense<0.000000e+00> : vector<8x128xf32>
    %43 = tpu.matmul %1, %42, %cst_27 {dimension_numbers = #tpu.dot_dimension_numbers<[1], [0], [0], [1], [0, 0, 1, 1], [], []>} : vector<8x16xbf16>, vector<16x128xbf16>, vector<8x128xf32> -> vector<8x128xf32>
    %c0_28 = arith.constant 0 : index
    %c0_29 = arith.constant 0 : index
    %44 = vector.load %arg8[%c0_28, %c0_29] : memref<128x128xbf16, #tpu.memory_space<vmem>>, vector<128x128xbf16>
    %cst_30 = arith.constant dense<0.000000e+00> : vector<8x128xf32>
    %45 = tpu.matmul %41, %44, %cst_30 {dimension_numbers = #tpu.dot_dimension_numbers<[1], [0], [0], [1], [0, 0, 1, 1], [], []>} : vector<8x128xbf16>, vector<128x128xbf16>, vector<8x128xf32> -> vector<8x128xf32>
    %46 = arith.addf %43, %45 : vector<8x128xf32>
    %47 = vector.broadcast %6 : vector<1x128xf32> to vector<8x128xf32>
    %48 = arith.addf %46, %47 : vector<8x128xf32>
    %cst_31 = arith.constant 0.000000e+00 : f32
    %49 = vector.broadcast %cst_31 : f32 to vector<8x128xf32>
    %50 = arith.maximumf %48, %49 : vector<8x128xf32>
    %51 = arith.truncf %50 : vector<8x128xf32> to vector<8x128xbf16>
    %c0_32 = arith.constant 0 : index
    %c0_33 = arith.constant 0 : index
    %52 = vector.load %arg9[%c0_32, %c0_33] : memref<128x128xbf16, #tpu.memory_space<vmem>>, vector<128x128xbf16>
    %cst_34 = arith.constant dense<0.000000e+00> : vector<8x128xf32>
    %53 = tpu.matmul %51, %52, %cst_34 {dimension_numbers = #tpu.dot_dimension_numbers<[1], [0], [0], [1], [0, 0, 1, 1], [], []>} : vector<8x128xbf16>, vector<128x128xbf16>, vector<8x128xf32> -> vector<8x128xf32>
    %54 = vector.broadcast %7 : vector<1x128xf32> to vector<8x128xf32>
    %55 = arith.addf %53, %54 : vector<8x128xf32>
    %cst_35 = arith.constant 0.000000e+00 : f32
    %56 = vector.broadcast %cst_35 : f32 to vector<8x128xf32>
    %57 = arith.maximumf %55, %56 : vector<8x128xf32>
    %58 = arith.truncf %57 : vector<8x128xf32> to vector<8x128xbf16>
    %c0_36 = arith.constant 0 : index
    %c0_37 = arith.constant 0 : index
    %59 = vector.load %arg10[%c0_36, %c0_37] : memref<128x128xbf16, #tpu.memory_space<vmem>>, vector<128x128xbf16>
    %cst_38 = arith.constant dense<0.000000e+00> : vector<8x128xf32>
    %60 = tpu.matmul %58, %59, %cst_38 {dimension_numbers = #tpu.dot_dimension_numbers<[1], [0], [0], [1], [0, 0, 1, 1], [], []>} : vector<8x128xbf16>, vector<128x128xbf16>, vector<8x128xf32> -> vector<8x128xf32>
    %61 = vector.broadcast %8 : vector<1x128xf32> to vector<8x128xf32>
    %62 = arith.addf %60, %61 : vector<8x128xf32>
    %63 = math.tanh %62 : vector<8x128xf32>
    %cst_39 = arith.constant 1.000000e+00 : f32
    %64 = vector.broadcast %cst_39 : f32 to vector<8x128xf32>
    %65 = arith.mulf %64, %63 : vector<8x128xf32>
    %c0_40 = arith.constant 0 : index
    %c0_41 = arith.constant 0 : index
    %66 = vector.load %arg12[%c0_40, %c0_41] : memref<8x256xf32, #tpu.memory_space<vmem>>, vector<8x128xf32>
    tpu.vector_store %arg12[%c0_40, %c0_41], %65 {strides = array<i32>} : memref<8x256xf32, #tpu.memory_space<vmem>>, vector<8x128xf32>,
    %c0_42 = arith.constant 0 : index
    %c128 = arith.constant 128 : index
    %67 = vector.load %arg12[%c0_42, %c128] : memref<8x256xf32, #tpu.memory_space<vmem>>, vector<8x128xf32>
    tpu.vector_store %arg12[%c0_42, %c128], %39 {strides = array<i32>} : memref<8x256xf32, #tpu.memory_space<vmem>>, vector<8x128xf32>,
    return
  }
  func.func @transform_0(%arg0: i32) -> (i32, i32) {
    %c0_i32 = arith.constant 0 : i32
    %c0_i32_0 = arith.constant 0 : i32
    return %arg0, %c0_i32 : i32, i32
  }
  func.func @transform_1(%arg0: i32) -> (i32, i32) {
    %c0_i32 = arith.constant 0 : i32
    %c0_i32_0 = arith.constant 0 : i32
    return %arg0, %c0_i32 : i32, i32
  }
  func.func @transform_2(%arg0: i32) -> (i32, i32) {
    %c0_i32 = arith.constant 0 : i32
    %c0_i32_0 = arith.constant 0 : i32
    return %arg0, %c0_i32 : i32, i32
  }
  func.func @transform_3(%arg0: i32) -> (i32, i32) {
    %c0_i32 = arith.constant 0 : i32
    %c0_i32_0 = arith.constant 0 : i32
    %c0_i32_1 = arith.constant 0 : i32
    return %c0_i32, %c0_i32_0 : i32, i32
  }
  func.func @transform_4(%arg0: i32) -> (i32, i32) {
    %c0_i32 = arith.constant 0 : i32
    %c0_i32_0 = arith.constant 0 : i32
    %c0_i32_1 = arith.constant 0 : i32
    return %c0_i32, %c0_i32_0 : i32, i32
  }
  func.func @transform_5(%arg0: i32) -> (i32, i32) {
    %c0_i32 = arith.constant 0 : i32
    %c0_i32_0 = arith.constant 0 : i32
    %c0_i32_1 = arith.constant 0 : i32
    return %c0_i32, %c0_i32_0 : i32, i32
  }
  func.func @transform_6(%arg0: i32) -> (i32, i32) {
    %c0_i32 = arith.constant 0 : i32
    %c0_i32_0 = arith.constant 0 : i32
    %c0_i32_1 = arith.constant 0 : i32
    return %c0_i32, %c0_i32_0 : i32, i32
  }
  func.func @transform_7(%arg0: i32) -> (i32, i32) {
    %c0_i32 = arith.constant 0 : i32
    %c0_i32_0 = arith.constant 0 : i32
    %c0_i32_1 = arith.constant 0 : i32
    return %c0_i32, %c0_i32_0 : i32, i32
  }
  func.func @transform_8(%arg0: i32) -> (i32, i32) {
    %c0_i32 = arith.constant 0 : i32
    %c0_i32_0 = arith.constant 0 : i32
    %c0_i32_1 = arith.constant 0 : i32
    return %c0_i32, %c0_i32_0 : i32, i32
  }
  func.func @transform_9(%arg0: i32) -> (i32, i32) {
    %c0_i32 = arith.constant 0 : i32
    %c0_i32_0 = arith.constant 0 : i32
    %c0_i32_1 = arith.constant 0 : i32
    return %c0_i32, %c0_i32_0 : i32, i32
  }
  func.func @transform_10(%arg0: i32) -> (i32, i32) {
    %c0_i32 = arith.constant 0 : i32
    %c0_i32_0 = arith.constant 0 : i32
    %c0_i32_1 = arith.constant 0 : i32
    return %c0_i32, %c0_i32_0 : i32, i32
  }
  func.func @transform_11(%arg0: i32) -> (i32, i32) {
    %c0_i32 = arith.constant 0 : i32
    %c0_i32_0 = arith.constant 0 : i32
    return %arg0, %c0_i32 : i32, i32
  }
}

module attributes {stable_mosaic.version = 11 : i64} {
  func.func @_vae_forward_kernel(%arg0: i32, %arg1: memref<8x24xbf16, #tpu.memory_space<vmem>>, %arg2: memref<8x16xbf16, #tpu.memory_space<vmem>>, %arg3: memref<8x128xf32, #tpu.memory_space<vmem>>, %arg4: memref<24x128xbf16, #tpu.memory_space<vmem>>, %arg5: memref<128x128xbf16, #tpu.memory_space<vmem>>, %arg6: memref<128x128xbf16, #tpu.memory_space<vmem>>, %arg7: memref<16x128xbf16, #tpu.memory_space<vmem>>, %arg8: memref<128x128xbf16, #tpu.memory_space<vmem>>, %arg9: memref<128x128xbf16, #tpu.memory_space<vmem>>, %arg10: memref<128x128xbf16, #tpu.memory_space<vmem>>, %arg11: memref<8x128xf32, #tpu.memory_space<vmem>>, %arg12: memref<8x256xf32, #tpu.memory_space<vmem>>) attributes {dimension_semantics = [#tpu.dimension_semantics<parallel>], iteration_bounds = array<i64: 2>, scalar_prefetch = 0 : i64, scratch_operands = 0 : i64, tpu.core_type = #tpu.core_type<tc>, window_params = [{transform_indices = @transform_0, window_bounds = array<i64: 8, 24>}, {transform_indices = @transform_1, window_bounds = array<i64: 8, 16>}, {transform_indices = @transform_2, window_bounds = array<i64: 8, 128>}, {pipeline_mode = #tpu.pipeline_mode<synchronous>, transform_indices = @transform_3, window_bounds = array<i64: 24, 128>}, {pipeline_mode = #tpu.pipeline_mode<synchronous>, transform_indices = @transform_4, window_bounds = array<i64: 128, 128>}, {pipeline_mode = #tpu.pipeline_mode<synchronous>, transform_indices = @transform_5, window_bounds = array<i64: 128, 128>}, {pipeline_mode = #tpu.pipeline_mode<synchronous>, transform_indices = @transform_6, window_bounds = array<i64: 16, 128>}, {pipeline_mode = #tpu.pipeline_mode<synchronous>, transform_indices = @transform_7, window_bounds = array<i64: 128, 128>}, {pipeline_mode = #tpu.pipeline_mode<synchronous>, transform_indices = @transform_8, window_bounds = array<i64: 128, 128>}, {pipeline_mode = #tpu.pipeline_mode<synchronous>, transform_indices = @transform_9, window_bounds = array<i64: 128, 128>}, {pipeline_mode = #tpu.pipeline_mode<synchronous>, transform_indices = @transform_10, window_bounds = array<i64: 8, 128>}, {transform_indices = @transform_11, window_bounds = array<i64: 8, 256>}]} {
    %c0 = arith.constant 0 : index
    %c0_0 = arith.constant 0 : index
    %0 = vector.load %arg1[%c0, %c0_0] : memref<8x24xbf16, #tpu.memory_space<vmem>>, vector<8x24xbf16>
    %c0_1 = arith.constant 0 : index
    %c0_2 = arith.constant 0 : index
    %1 = vector.load %arg2[%c0_1, %c0_2] : memref<8x16xbf16, #tpu.memory_space<vmem>>, vector<8x16xbf16>
    %c0_3 = arith.constant 0 : index
    %c0_4 = arith.constant 0 : index
    %2 = vector.load %arg3[%c0_3, %c0_4] : memref<8x128xf32, #tpu.memory_space<vmem>>, vector<8x128xf32>
    %c0_5 = arith.constant 0 : index
    %c0_6 = arith.constant 0 : index
    %3 = vector.load %arg11[%c0_5, %c0_6] : memref<8x128xf32, #tpu.memory_space<vmem>>, vector<1x128xf32>
    %c1 = arith.constant 1 : index
    %c0_7 = arith.constant 0 : index
    %4 = vector.load %arg11[%c1, %c0_7] : memref<8x128xf32, #tpu.memory_space<vmem>>, vector<1x128xf32>
    %c2 = arith.constant 2 : index
    %c0_8 = arith.constant 0 : index
    %5 = vector.load %arg11[%c2, %c0_8] : memref<8x128xf32, #tpu.memory_space<vmem>>, vector<1x128xf32>
    %c3 = arith.constant 3 : index
    %c0_9 = arith.constant 0 : index
    %6 = vector.load %arg11[%c3, %c0_9] : memref<8x128xf32, #tpu.memory_space<vmem>>, vector<1x128xf32>
    %c4 = arith.constant 4 : index
    %c0_10 = arith.constant 0 : index
    %7 = vector.load %arg11[%c4, %c0_10] : memref<8x128xf32, #tpu.memory_space<vmem>>, vector<1x128xf32>
    %c5 = arith.constant 5 : index
    %c0_11 = arith.constant 0 : index
    %8 = vector.load %arg11[%c5, %c0_11] : memref<8x128xf32, #tpu.memory_space<vmem>>, vector<1x128xf32>
    %c0_12 = arith.constant 0 : index
    %c0_13 = arith.constant 0 : index
    %9 = vector.load %arg4[%c0_12, %c0_13] : memref<24x128xbf16, #tpu.memory_space<vmem>>, vector<24x128xbf16>
    %cst = arith.constant dense<0.000000e+00> : vector<8x128xf32>
    %10 = tpu.matmul %0, %9, %cst {dimension_numbers = #tpu.dot_dimension_numbers<[1], [0], [0], [1], [0, 0, 1, 1], [], []>} : vector<8x24xbf16>, vector<24x128xbf16>, vector<8x128xf32> -> vector<8x128xf32>
    %11 = vector.broadcast %3 : vector<1x128xf32> to vector<8x128xf32>
    %12 = arith.addf %10, %11 : vector<8x128xf32>
    %cst_14 = arith.constant 0.000000e+00 : f32
    %13 = vector.broadcast %cst_14 : f32 to vector<8x128xf32>
    %14 = arith.maximumf %12, %13 : vector<8x128xf32>
    %15 = arith.truncf %14 : vector<8x128xf32> to vector<8x128xbf16>
    %c0_15 = arith.constant 0 : index
    %c0_16 = arith.constant 0 : index
    %16 = vector.load %arg5[%c0_15, %c0_16] : memref<128x128xbf16, #tpu.memory_space<vmem>>, vector<128x128xbf16>
    %cst_17 = arith.constant dense<0.000000e+00> : vector<8x128xf32>
    %17 = tpu.matmul %15, %16, %cst_17 {dimension_numbers = #tpu.dot_dimension_numbers<[1], [0], [0], [1], [0, 0, 1, 1], [], []>} : vector<8x128xbf16>, vector<128x128xbf16>, vector<8x128xf32> -> vector<8x128xf32>
    %18 = vector.broadcast %4 : vector<1x128xf32> to vector<8x128xf32>
    %19 = arith.addf %17, %18 : vector<8x128xf32>
    %cst_18 = arith.constant 0.000000e+00 : f32
    %20 = vector.broadcast %cst_18 : f32 to vector<8x128xf32>
    %21 = arith.maximumf %19, %20 : vector<8x128xf32>
    %22 = arith.truncf %21 : vector<8x128xf32> to vector<8x128xbf16>
    %c0_19 = arith.constant 0 : index
    %c0_20 = arith.constant 0 : index
    %23 = vector.load %arg6[%c0_19, %c0_20] : memref<128x128xbf16, #tpu.memory_space<vmem>>, vector<128x128xbf16>
    %cst_21 = arith.constant dense<0.000000e+00> : vector<8x128xf32>
    %24 = tpu.matmul %22, %23, %cst_21 {dimension_numbers = #tpu.dot_dimension_numbers<[1], [0], [0], [1], [0, 0, 1, 1], [], []>} : vector<8x128xbf16>, vector<128x128xbf16>, vector<8x128xf32> -> vector<8x128xf32>
    %25 = vector.broadcast %5 : vector<1x128xf32> to vector<8x128xf32>
    %26 = arith.addf %24, %25 : vector<8x128xf32>
    %27 = tpu.iota {dimensions = array<i32: 1>} : vector<8x128xi32>
    %cst_22 = arith.constant -4.000000e+00 : f32
    %cst_23 = arith.constant 1.500000e+01 : f32
    %28 = vector.broadcast %cst_22 : f32 to vector<8x128xf32>
    %29 = arith.maximumf %28, %26 : vector<8x128xf32>
    %30 = vector.broadcast %cst_23 : f32 to vector<8x128xf32>
    %31 = arith.minimumf %30, %29 : vector<8x128xf32>
    %32 = math.exp %31 : vector<8x128xf32>
    %c16_i32 = arith.constant 16 : i32
    %33 = vector.broadcast %c16_i32 : i32 to vector<8x128xi32>
    %34 = arith.cmpi slt, %27, %33 : vector<8x128xi32>
    %c32_i32 = arith.constant 32 : i32
    %35 = vector.broadcast %c32_i32 : i32 to vector<8x128xi32>
    %36 = arith.cmpi slt, %27, %35 : vector<8x128xi32>
    %cst_24 = arith.constant 0.000000e+00 : f32
    %37 = vector.broadcast %cst_24 : f32 to vector<8x128xf32>
    %38 = arith.select %36, %32, %37 : vector<8x128xi1>, vector<8x128xf32>
    %39 = arith.select %34, %26, %38 : vector<8x128xi1>, vector<8x128xf32>
    %40 = arith.mulf %39, %2 : vector<8x128xf32>
    %41 = arith.truncf %40 : vector<8x128xf32> to vector<8x128xbf16>
    %c0_25 = arith.constant 0 : index
    %c0_26 = arith.constant 0 : index
    %42 = vector.load %arg7[%c0_25, %c0_26] : memref<16x128xbf16, #tpu.memory_space<vmem>>, vector<16x128xbf16>
    %cst_27 = arith.constant dense<0.000000e+00> : vector<8x128xf32>
    %43 = tpu.matmul %1, %42, %cst_27 {dimension_numbers = #tpu.dot_dimension_numbers<[1], [0], [0], [1], [0, 0, 1, 1], [], []>} : vector<8x16xbf16>, vector<16x128xbf16>, vector<8x128xf32> -> vector<8x128xf32>
    %c0_28 = arith.constant 0 : index
    %c0_29 = arith.constant 0 : index
    %44 = vector.load %arg8[%c0_28, %c0_29] : memref<128x128xbf16, #tpu.memory_space<vmem>>, vector<128x128xbf16>
    %cst_30 = arith.constant dense<0.000000e+00> : vector<8x128xf32>
    %45 = tpu.matmul %41, %44, %cst_30 {dimension_numbers = #tpu.dot_dimension_numbers<[1], [0], [0], [1], [0, 0, 1, 1], [], []>} : vector<8x128xbf16>, vector<128x128xbf16>, vector<8x128xf32> -> vector<8x128xf32>
    %46 = arith.addf %43, %45 : vector<8x128xf32>
    %47 = vector.broadcast %6 : vector<1x128xf32> to vector<8x128xf32>
    %48 = arith.addf %46, %47 : vector<8x128xf32>
    %cst_31 = arith.constant 0.000000e+00 : f32
    %49 = vector.broadcast %cst_31 : f32 to vector<8x128xf32>
    %50 = arith.maximumf %48, %49 : vector<8x128xf32>
    %51 = arith.truncf %50 : vector<8x128xf32> to vector<8x128xbf16>
    %c0_32 = arith.constant 0 : index
    %c0_33 = arith.constant 0 : index
    %52 = vector.load %arg9[%c0_32, %c0_33] : memref<128x128xbf16, #tpu.memory_space<vmem>>, vector<128x128xbf16>
    %cst_34 = arith.constant dense<0.000000e+00> : vector<8x128xf32>
    %53 = tpu.matmul %51, %52, %cst_34 {dimension_numbers = #tpu.dot_dimension_numbers<[1], [0], [0], [1], [0, 0, 1, 1], [], []>} : vector<8x128xbf16>, vector<128x128xbf16>, vector<8x128xf32> -> vector<8x128xf32>
    %54 = vector.broadcast %7 : vector<1x128xf32> to vector<8x128xf32>
    %55 = arith.addf %53, %54 : vector<8x128xf32>
    %cst_35 = arith.constant 0.000000e+00 : f32
    %56 = vector.broadcast %cst_35 : f32 to vector<8x128xf32>
    %57 = arith.maximumf %55, %56 : vector<8x128xf32>
    %58 = arith.truncf %57 : vector<8x128xf32> to vector<8x128xbf16>
    %c0_36 = arith.constant 0 : index
    %c0_37 = arith.constant 0 : index
    %59 = vector.load %arg10[%c0_36, %c0_37] : memref<128x128xbf16, #tpu.memory_space<vmem>>, vector<128x128xbf16>
    %cst_38 = arith.constant dense<0.000000e+00> : vector<8x128xf32>
    %60 = tpu.matmul %58, %59, %cst_38 {dimension_numbers = #tpu.dot_dimension_numbers<[1], [0], [0], [1], [0, 0, 1, 1], [], []>} : vector<8x128xbf16>, vector<128x128xbf16>, vector<8x128xf32> -> vector<8x128xf32>
    %61 = vector.broadcast %8 : vector<1x128xf32> to vector<8x128xf32>
    %62 = arith.addf %60, %61 : vector<8x128xf32>
    %63 = math.tanh %62 : vector<8x128xf32>
    %cst_39 = arith.constant 1.000000e+00 : f32
    %64 = vector.broadcast %cst_39 : f32 to vector<8x128xf32>
    %65 = arith.mulf %64, %63 : vector<8x128xf32>
    %c0_40 = arith.constant 0 : index
    %c0_41 = arith.constant 0 : index
    %66 = vector.load %arg12[%c0_40, %c0_41] : memref<8x256xf32, #tpu.memory_space<vmem>>, vector<8x128xf32>
    tpu.vector_store %arg12[%c0_40, %c0_41], %65 {strides = array<i32>} : memref<8x256xf32, #tpu.memory_space<vmem>>, vector<8x128xf32>,
    %c0_42 = arith.constant 0 : index
    %c128 = arith.constant 128 : index
    %67 = vector.load %arg12[%c0_42, %c128] : memref<8x256xf32, #tpu.memory_space<vmem>>, vector<8x128xf32>
    tpu.vector_store %arg12[%c0_42, %c128], %39 {strides = array<i32>} : memref<8x256xf32, #tpu.memory_space<vmem>>, vector<8x128xf32>,
    return
  }
  func.func @transform_0(%arg0: i32) -> (i32, i32) {
    %c0_i32 = arith.constant 0 : i32
    %c0_i32_0 = arith.constant 0 : i32
    return %arg0, %c0_i32 : i32, i32
  }
  func.func @transform_1(%arg0: i32) -> (i32, i32) {
    %c0_i32 = arith.constant 0 : i32
    %c0_i32_0 = arith.constant 0 : i32
    return %arg0, %c0_i32 : i32, i32
  }
  func.func @transform_2(%arg0: i32) -> (i32, i32) {
    %c0_i32 = arith.constant 0 : i32
    %c0_i32_0 = arith.constant 0 : i32
    return %arg0, %c0_i32 : i32, i32
  }
  func.func @transform_3(%arg0: i32) -> (i32, i32) {
    %c0_i32 = arith.constant 0 : i32
    %c0_i32_0 = arith.constant 0 : i32
    %c0_i32_1 = arith.constant 0 : i32
    return %c0_i32, %c0_i32_0 : i32, i32
  }
  func.func @transform_4(%arg0: i32) -> (i32, i32) {
    %c0_i32 = arith.constant 0 : i32
    %c0_i32_0 = arith.constant 0 : i32
    %c0_i32_1 = arith.constant 0 : i32
    return %c0_i32, %c0_i32_0 : i32, i32
  }
  func.func @transform_5(%arg0: i32) -> (i32, i32) {
    %c0_i32 = arith.constant 0 : i32
    %c0_i32_0 = arith.constant 0 : i32
    %c0_i32_1 = arith.constant 0 : i32
    return %c0_i32, %c0_i32_0 : i32, i32
  }
  func.func @transform_6(%arg0: i32) -> (i32, i32) {
    %c0_i32 = arith.constant 0 : i32
    %c0_i32_0 = arith.constant 0 : i32
    %c0_i32_1 = arith.constant 0 : i32
    return %c0_i32, %c0_i32_0 : i32, i32
  }
  func.func @transform_7(%arg0: i32) -> (i32, i32) {
    %c0_i32 = arith.constant 0 : i32
    %c0_i32_0 = arith.constant 0 : i32
    %c0_i32_1 = arith.constant 0 : i32
    return %c0_i32, %c0_i32_0 : i32, i32
  }
  func.func @transform_8(%arg0: i32) -> (i32, i32) {
    %c0_i32 = arith.constant 0 : i32
    %c0_i32_0 = arith.constant 0 : i32
    %c0_i32_1 = arith.constant 0 : i32
    return %c0_i32, %c0_i32_0 : i32, i32
  }
  func.func @transform_9(%arg0: i32) -> (i32, i32) {
    %c0_i32 = arith.constant 0 : i32
    %c0_i32_0 = arith.constant 0 : i32
    %c0_i32_1 = arith.constant 0 : i32
    return %c0_i32, %c0_i32_0 : i32, i32
  }
  func.func @transform_10(%arg0: i32) -> (i32, i32) {
    %c0_i32 = arith.constant 0 : i32
    %c0_i32_0 = arith.constant 0 : i32
    %c0_i32_1 = arith.constant 0 : i32
    return %c0_i32, %c0_i32_0 : i32, i32
  }
  func.func @transform_11(%arg0: i32) -> (i32, i32) {
    %c0_i32 = arith.constant 0 : i32
    %c0_i32_0 = arith.constant 0 : i32
    return %arg0, %c0_i32 : i32, i32
  }
}

</mosaic_0001>

<llo_original>
// kernel: tpu_custom_call.1
$region0: #{tpu_custom_call.1}
  #allocation0 [shape = 'u32[]', space=smem, size = 0x4, offset = 0x4, fixed_abs, tag = 'smem constant byte address 0x4 - core index']
  #allocation1 [shape = 'u32[72,128]{1,0:T(1,128)}', space=vmem, size = 0x9000, scoped, tag = 'internal scratch']
  %s0 = inlined_call_operand.hbm [shape: bf16[16,24], index: 0, kind: input, shape index: {}]
  %s1 = inlined_call_operand.hbm [shape: bf16[16,16], index: 1, kind: input, shape index: {}]
  %s2 = inlined_call_operand.hbm [shape: f32[16,128], index: 2, kind: input, shape index: {}]
  %s3 = inlined_call_operand.hbm [shape: bf16[24,128], index: 3, kind: input, shape index: {}]
  %s4 = inlined_call_operand.hbm [shape: bf16[128,128], index: 4, kind: input, shape index: {}]
  %s5 = inlined_call_operand.hbm [shape: bf16[128,128], index: 5, kind: input, shape index: {}]
  %s6 = inlined_call_operand.hbm [shape: bf16[16,128], index: 6, kind: input, shape index: {}]
  %s7 = inlined_call_operand.hbm [shape: bf16[128,128], index: 7, kind: input, shape index: {}]
  %s8 = inlined_call_operand.hbm [shape: bf16[128,128], index: 8, kind: input, shape index: {}]
  %s9 = inlined_call_operand.hbm [shape: bf16[128,128], index: 9, kind: input, shape index: {}]
  %s10 = inlined_call_operand.vmem [shape: f32[8,128], index: 10, kind: input, shape index: {}]
  %s11 = inlined_call_operand.hbm [shape: f32[16,256], index: 11, kind: output, shape index: {}]
  %s12 = sld [smem:[#allocation0]]
  $region117: #{tpu_custom_call.1} parent=0
    _
  %s14 = ssub.s32 1, %s12
  %s15 = scalar_select 0, %s14, %s12
  $region1: #{tpu_custom_call.1} parent=0
    #allocation2 [shape = 'u8[4096]{0}', space=vmem, size = 0x1000, scoped, tag = 'input window, operand 0']
    #allocation3 [shape = 's32[2]{0}', space=sflag, size = 0x8, scoped, tag = 'scoped memory for tpu_custom_call.1']
    #allocation4 [shape = 's32[2]{0}', space=sflag, size = 0x8, scoped, tag = 'scoped memory for tpu_custom_call.1']
    #allocation5 [shape = 'u8[4096]{0}', space=vmem, size = 0x1000, scoped, tag = 'input window, operand 1']
    #allocation6 [shape = 's32[2]{0}', space=sflag, size = 0x8, scoped, tag = 'scoped memory for tpu_custom_call.1']
    #allocation7 [shape = 'u8[8192]{0}', space=vmem, size = 0x2000, scoped, tag = 'input window, operand 2']
    #allocation8 [shape = 'u8[6144]{0}', space=vmem, size = 0x1800, scoped, tag = 'input window, operand 3, single buffered']
    #allocation9 [shape = 's32[1]{0}', space=sflag, size = 0x4, scoped, tag = 'scoped memory for tpu_custom_call.1']
    #allocation10 [shape = 'u8[32768]{0}', space=vmem, size = 0x8000, scoped, tag = 'input window, operand 4, single buffered']
    #allocation11 [shape = 'u8[32768]{0}', space=vmem, size = 0x8000, scoped, tag = 'input window, operand 5, single buffered']
    #allocation12 [shape = 's32[1]{0}', space=sflag, size = 0x4, scoped, tag = 'scoped memory for tpu_custom_call.1']
    #allocation13 [shape = 'u8[4096]{0}', space=vmem, size = 0x1000, scoped, tag = 'input window, operand 6, single buffered']
    #allocation14 [shape = 'u8[32768]{0}', space=vmem, size = 0x8000, scoped, tag = 'input window, operand 7, single buffered']
    #allocation15 [shape = 's32[1]{0}', space=sflag, size = 0x4, scoped, tag = 'scoped memory for tpu_custom_call.1']
    #allocation16 [shape = 'u8[32768]{0}', space=vmem, size = 0x8000, scoped, tag = 'input window, operand 8, single buffered']
    #allocation17 [shape = 'u8[32768]{0}', space=vmem, size = 0x8000, scoped, tag = 'input window, operand 9, single buffered']
    #allocation18 [shape = 's32[1]{0}', space=sflag, size = 0x4, scoped, tag = 'scoped memory for tpu_custom_call.1']
    #allocation19 [shape = 'u8[16384]{0}', space=vmem, size = 0x4000, scoped, tag = 'output window, operand 0']
    %16 = vsyncpa [#allocation3], 0
    %s17 = scalar_lea.sflag [#allocation3], 1
    %18 = vsyncpa %s17, 0
    %19 = vsyncpa [#allocation6], 0
    %s20 = scalar_lea.sflag [#allocation6], 1
    %21 = vsyncpa %s20, 0
    %22 = vsyncpa [#allocation9], 0
    %23 = vsyncpa [#allocation12], 0
    %24 = vsyncpa [#allocation15], 0
    %25 = vsyncpa [#allocation18], 0
    %26 = vsyncpa [#allocation4], 0
    %s27 = scalar_lea.sflag [#allocation4], 1
    %28 = vsyncpa %s27, 0
    loop: start=0, step=1, limit=4
    $region2: #{tpu_custom_call.1} parent=1 // loop_pre_header
      _
    $region3: #{tpu_custom_call.1} parent=1 // loop_header
      %s30 = sphi 0, %s34
      %p31 = scmp.ge.s32.totalorder %s30, 4
      %s40 = sphi 0, %s42
      %s43 = sphi 0, %s40
      %s44 = sphi 0, %s43
      %s60 = sphi 0, %s44
      %s66 = sphi 0, %s68
      %s69 = sphi 0, %s66
      %s70 = sphi 0, %s69
      %s86 = sphi 0, %s70
      %s92 = sphi 0, %s94
      %s95 = sphi 0, %s92
      %s96 = sphi 0, %s95
      %s112 = sphi 0, %s96
      %s116 = sphi 0, %s116
      %s118 = sphi 0, %s116
      %s119 = sphi 0, %s118
      %s133 = sphi 0, %s119
      %s137 = sphi 0, %s137
      %s139 = sphi 0, %s137
      %s140 = sphi 0, %s139
      %s154 = sphi 0, %s140
      %s158 = sphi 0, %s158
      %s160 = sphi 0, %s158
      %s161 = sphi 0, %s160
      %s175 = sphi 0, %s161
      %s179 = sphi 0, %s179
      %s181 = sphi 0, %s179
      %s182 = sphi 0, %s181
      %s196 = sphi 0, %s182
      %s200 = sphi 0, %s200
      %s202 = sphi 0, %s200
      %s203 = sphi 0, %s202
      %s217 = sphi 0, %s203
      %s221 = sphi 0, %s221
      %s223 = sphi 0, %s221
      %s224 = sphi 0, %s223
      %s238 = sphi 0, %s224
      %s242 = sphi 0, %s242
      %s244 = sphi 0, %s242
      %s245 = sphi 0, %s244
      %s259 = sphi 0, %s245
      %s263 = sphi 0, %s263
      %s265 = sphi 0, %s263
      %s266 = sphi 0, %s265
      %s280 = sphi 0, %s266
      %s286 = sphi 0, %s288
      %s289 = sphi 0, %s286
      %s290 = sphi 0, %s289
      %s306 = sphi 0, %s290
    $region4: #{tpu_custom_call.1} parent=1 // loop_header_branch
      %33 = sbr.rel (%p31) target = $region8
    $region5: #{tpu_custom_call.1} parent=1 // loop_body
      %s35 = ssub.s32 %s30, 1
      %s36 = ssub.s32 %s30, 2
      %s37 = sadd.s32 %s30, 1
      %s38 = ssub.s32 %s30, %s37
      %p39 = scmp.eq.s32.totalorder %s38, 0
      %s41 = sadd.s32 %s40, 1
      %s42 = scalar_select %p39, %s40, %s41
      %p45 = pneg %p39
      %p46 = scmp.eq.s32.totalorder %s30, 1
      %p47 = por %p45, %p46
      %p48 = scmp.ne.s32.totalorder %s40, %s43
      %p49 = scmp.eq.s32.totalorder %s30, 0
      %p50 = por %p48, %p49
      %p51 = scmp.ne.s32.totalorder %s40, %s43
      %p52 = scmp.eq.s32.totalorder %s35, 1
      %p53 = por %p51, %p52
      %p54 = scmp.ne.s32.totalorder %s43, %s44
      %p55 = scmp.eq.s32.totalorder %s35, 0
      %p56 = por %p54, %p55
      %p57 = scmp.ne.s32.totalorder %s43, %s44
      %p58 = scmp.eq.s32.totalorder %s36, 1
      %p59 = por %p57, %p58
      %p61 = scmp.ne.s32.totalorder %s44, %s60
      %p62 = scmp.eq.s32.totalorder %s36, 0
      %p63 = por %p61, %p62
      %s64 = ssub.s32 %s30, %s37
      %p65 = scmp.eq.s32.totalorder %s64, 0
      %s67 = sadd.s32 %s66, 1
      %s68 = scalar_select %p65, %s66, %s67
      %p71 = pneg %p65
      %p72 = scmp.eq.s32.totalorder %s30, 1
      %p73 = por %p71, %p72
      %p74 = scmp.ne.s32.totalorder %s66, %s69
      %p75 = scmp.eq.s32.totalorder %s30, 0
      %p76 = por %p74, %p75
      %p77 = scmp.ne.s32.totalorder %s66, %s69
      %p78 = scmp.eq.s32.totalorder %s35, 1
      %p79 = por %p77, %p78
      %p80 = scmp.ne.s32.totalorder %s69, %s70
      %p81 = scmp.eq.s32.totalorder %s35, 0
      %p82 = por %p80, %p81
      %p83 = scmp.ne.s32.totalorder %s69, %s70
      %p84 = scmp.eq.s32.totalorder %s36, 1
      %p85 = por %p83, %p84
      %p87 = scmp.ne.s32.totalorder %s70, %s86
      %p88 = scmp.eq.s32.totalorder %s36, 0
      %p89 = por %p87, %p88
      %s90 = ssub.s32 %s30, %s37
      %p91 = scmp.eq.s32.totalorder %s90, 0
      %s93 = sadd.s32 %s92, 1
      %s94 = scalar_select %p91, %s92, %s93
      %p97 = pneg %p91
      %p98 = scmp.eq.s32.totalorder %s30, 1
      %p99 = por %p97, %p98
      %p100 = scmp.ne.s32.totalorder %s92, %s95
      %p101 = scmp.eq.s32.totalorder %s30, 0
      %p102 = por %p100, %p101
      %p103 = scmp.ne.s32.totalorder %s92, %s95
      %p104 = scmp.eq.s32.totalorder %s35, 1
      %p105 = por %p103, %p104
      %p106 = scmp.ne.s32.totalorder %s95, %s96
      %p107 = scmp.eq.s32.totalorder %s35, 0
      %p108 = por %p106, %p107
      %p109 = scmp.ne.s32.totalorder %s95, %s96
      %p110 = scmp.eq.s32.totalorder %s36, 1
      %p111 = por %p109, %p110
      %p113 = scmp.ne.s32.totalorder %s96, %s112
      %p114 = scmp.eq.s32.totalorder %s36, 0
      %p115 = por %p113, %p114
      %s117 = sadd.s32 %s116, 1
      %p120 = scmp.eq.s32.totalorder %s30, 1
      %p121 = scmp.ne.s32.totalorder %s116, %s118
      %p122 = scmp.eq.s32.totalorder %s30, 0
      %p123 = por %p121, %p122
      %p124 = scmp.ne.s32.totalorder %s116, %s118
      %p125 = scmp.eq.s32.totalorder %s35, 1
      %p126 = por %p124, %p125
      %p127 = scmp.ne.s32.totalorder %s118, %s119
      %p128 = scmp.eq.s32.totalorder %s35, 0
      %p129 = por %p127, %p128
      %p130 = scmp.ne.s32.totalorder %s118, %s119
      %p131 = scmp.eq.s32.totalorder %s36, 1
      %p132 = por %p130, %p131
      %p134 = scmp.ne.s32.totalorder %s119, %s133
      %p135 = scmp.eq.s32.totalorder %s36, 0
      %p136 = por %p134, %p135
      %s138 = sadd.s32 %s137, 1
      %p141 = scmp.eq.s32.totalorder %s30, 1
      %p142 = scmp.ne.s32.totalorder %s137, %s139
      %p143 = scmp.eq.s32.totalorder %s30, 0
      %p144 = por %p142, %p143
      %p145 = scmp.ne.s32.totalorder %s137, %s139
      %p146 = scmp.eq.s32.totalorder %s35, 1
      %p147 = por %p145, %p146
      %p148 = scmp.ne.s32.totalorder %s139, %s140
      %p149 = scmp.eq.s32.totalorder %s35, 0
      %p150 = por %p148, %p149
      %p151 = scmp.ne.s32.totalorder %s139, %s140
      %p152 = scmp.eq.s32.totalorder %s36, 1
      %p153 = por %p151, %p152
      %p155 = scmp.ne.s32.totalorder %s140, %s154
      %p156 = scmp.eq.s32.totalorder %s36, 0
      %p157 = por %p155, %p156
      %s159 = sadd.s32 %s158, 1
      %p162 = scmp.eq.s32.totalorder %s30, 1
      %p163 = scmp.ne.s32.totalorder %s158, %s160
      %p164 = scmp.eq.s32.totalorder %s30, 0
      %p165 = por %p163, %p164
      %p166 = scmp.ne.s32.totalorder %s158, %s160
      %p167 = scmp.eq.s32.totalorder %s35, 1
      %p168 = por %p166, %p167
      %p169 = scmp.ne.s32.totalorder %s160, %s161
      %p170 = scmp.eq.s32.totalorder %s35, 0
      %p171 = por %p169, %p170
      %p172 = scmp.ne.s32.totalorder %s160, %s161
      %p173 = scmp.eq.s32.totalorder %s36, 1
      %p174 = por %p172, %p173
      %p176 = scmp.ne.s32.totalorder %s161, %s175
      %p177 = scmp.eq.s32.totalorder %s36, 0
      %p178 = por %p176, %p177
      %s180 = sadd.s32 %s179, 1
      %p183 = scmp.eq.s32.totalorder %s30, 1
      %p184 = scmp.ne.s32.totalorder %s179, %s181
      %p185 = scmp.eq.s32.totalorder %s30, 0
      %p186 = por %p184, %p185
      %p187 = scmp.ne.s32.totalorder %s179, %s181
      %p188 = scmp.eq.s32.totalorder %s35, 1
      %p189 = por %p187, %p188
      %p190 = scmp.ne.s32.totalorder %s181, %s182
      %p191 = scmp.eq.s32.totalorder %s35, 0
      %p192 = por %p190, %p191
      %p193 = scmp.ne.s32.totalorder %s181, %s182
      %p194 = scmp.eq.s32.totalorder %s36, 1
      %p195 = por %p193, %p194
      %p197 = scmp.ne.s32.totalorder %s182, %s196
      %p198 = scmp.eq.s32.totalorder %s36, 0
      %p199 = por %p197, %p198
      %s201 = sadd.s32 %s200, 1
      %p204 = scmp.eq.s32.totalorder %s30, 1
      %p205 = scmp.ne.s32.totalorder %s200, %s202
      %p206 = scmp.eq.s32.totalorder %s30, 0
      %p207 = por %p205, %p206
      %p208 = scmp.ne.s32.totalorder %s200, %s202
      %p209 = scmp.eq.s32.totalorder %s35, 1
      %p210 = por %p208, %p209
      %p211 = scmp.ne.s32.totalorder %s202, %s203
      %p212 = scmp.eq.s32.totalorder %s35, 0
      %p213 = por %p211, %p212
      %p214 = scmp.ne.s32.totalorder %s202, %s203
      %p215 = scmp.eq.s32.totalorder %s36, 1
      %p216 = por %p214, %p215
      %p218 = scmp.ne.s32.totalorder %s203, %s217
      %p219 = scmp.eq.s32.totalorder %s36, 0
      %p220 = por %p218, %p219
      %s222 = sadd.s32 %s221, 1
      %p225 = scmp.eq.s32.totalorder %s30, 1
      %p226 = scmp.ne.s32.totalorder %s221, %s223
      %p227 = scmp.eq.s32.totalorder %s30, 0
      %p228 = por %p226, %p227
      %p229 = scmp.ne.s32.totalorder %s221, %s223
      %p230 = scmp.eq.s32.totalorder %s35, 1
      %p231 = por %p229, %p230
      %p232 = scmp.ne.s32.totalorder %s223, %s224
      %p233 = scmp.eq.s32.totalorder %s35, 0
      %p234 = por %p232, %p233
      %p235 = scmp.ne.s32.totalorder %s223, %s224
      %p236 = scmp.eq.s32.totalorder %s36, 1
      %p237 = por %p235, %p236
      %p239 = scmp.ne.s32.totalorder %s224, %s238
      %p240 = scmp.eq.s32.totalorder %s36, 0
      %p241 = por %p239, %p240
      %s243 = sadd.s32 %s242, 1
      %p246 = scmp.eq.s32.totalorder %s30, 1
      %p247 = scmp.ne.s32.totalorder %s242, %s244
      %p248 = scmp.eq.s32.totalorder %s30, 0
      %p249 = por %p247, %p248
      %p250 = scmp.ne.s32.totalorder %s242, %s244
      %p251 = scmp.eq.s32.totalorder %s35, 1
      %p252 = por %p250, %p251
      %p253 = scmp.ne.s32.totalorder %s244, %s245
      %p254 = scmp.eq.s32.totalorder %s35, 0
      %p255 = por %p253, %p254
      %p256 = scmp.ne.s32.totalorder %s244, %s245
      %p257 = scmp.eq.s32.totalorder %s36, 1
      %p258 = por %p256, %p257
      %p260 = scmp.ne.s32.totalorder %s245, %s259
      %p261 = scmp.eq.s32.totalorder %s36, 0
      %p262 = por %p260, %p261
      %s264 = sadd.s32 %s263, 1
      %p267 = scmp.eq.s32.totalorder %s30, 1
      %p268 = scmp.ne.s32.totalorder %s263, %s265
      %p269 = scmp.eq.s32.totalorder %s30, 0
      %p270 = por %p268, %p269
      %p271 = scmp.ne.s32.totalorder %s263, %s265
      %p272 = scmp.eq.s32.totalorder %s35, 1
      %p273 = por %p271, %p272
      %p274 = scmp.ne.s32.totalorder %s265, %s266
      %p275 = scmp.eq.s32.totalorder %s35, 0
      %p276 = por %p274, %p275
      %p277 = scmp.ne.s32.totalorder %s265, %s266
      %p278 = scmp.eq.s32.totalorder %s36, 1
      %p279 = por %p277, %p278
      %p281 = scmp.ne.s32.totalorder %s266, %s280
      %p282 = scmp.eq.s32.totalorder %s36, 0
      %p283 = por %p281, %p282
      %s284 = ssub.s32 %s30, %s37
      %p285 = scmp.eq.s32.totalorder %s284, 0
      %s287 = sadd.s32 %s286, 1
      %s288 = scalar_select %p285, %s286, %s287
      %p291 = pneg %p285
      %p292 = scmp.eq.s32.totalorder %s30, 1
      %p293 = por %p291, %p292
      %p294 = scmp.ne.s32.totalorder %s286, %s289
      %p295 = scmp.eq.s32.totalorder %s30, 0
      %p296 = por %p294, %p295
      %p297 = scmp.ne.s32.totalorder %s286, %s289
      %p298 = scmp.eq.s32.totalorder %s35, 1
      %p299 = por %p297, %p298
      %p300 = scmp.ne.s32.totalorder %s289, %s290
      %p301 = scmp.eq.s32.totalorder %s35, 0
      %p302 = por %p300, %p301
      %p303 = scmp.ne.s32.totalorder %s289, %s290
      %p304 = scmp.eq.s32.totalorder %s36, 1
      %p305 = por %p303, %p304
      %p307 = scmp.ne.s32.totalorder %s290, %s306
      %p308 = scmp.eq.s32.totalorder %s36, 0
      %p309 = por %p307, %p308
      %p310 = scmp.le.s32.totalorder 1, %s30
      %p311 = scmp.lt.s32.totalorder %s30, 3
      %p312 = pnand %p310, %p311
      %p313 = pneg %p312
      // Predicated region
      $region9: #{tpu_custom_call.1} parent=5 // pred_check
        _
      $region10: #{tpu_custom_call.1} parent=5 // pred_check_branch
        %315 = sbr.rel (%p312) target = $region12
      $region11: #{tpu_custom_call.1} parent=5 // pred_region
        %s316 = ssub.s32 %s30, 1
        // Predicated region
        $region13: #{tpu_custom_call.1} parent=11 // pred_check
          %p317 = pneg %p129
        $region14: #{tpu_custom_call.1} parent=11 // pred_check_branch
          %319 = sbr.rel (%p317) target = $region16
        $region15: #{tpu_custom_call.1} parent=11 // pred_region
          %321 = vsyncadd [#allocation9], 0
          %s322 = sshll.u32 %s3, 4
          %s323 = int_to_ptr.hbm [resolvable:$true] %s322
          %s324 = sshll.u32 [#allocation8], 4
          %s325 = int_to_ptr.vmem [resolvable:$true] %s324
          %330 = dma.hbm_to_vmem [thread:$0]  %s323, 192, %s325, [#allocation9], 64, 64, 4
        $region16: #{tpu_custom_call.1} parent=11 // pred_fallthru
          _
        // Predicated region
        $region17: #{tpu_custom_call.1} parent=11 // pred_check
          %p331 = pneg %p150
        $region18: #{tpu_custom_call.1} parent=11 // pred_check_branch
          %333 = sbr.rel (%p331) target = $region20
        $region19: #{tpu_custom_call.1} parent=11 // pred_region
          %335 = vsyncadd [#allocation9], 0
          %s336 = sshll.u32 %s4, 4
          %s337 = int_to_ptr.hbm [resolvable:$true] %s336
          %s338 = sshll.u32 [#allocation10], 4
          %s339 = int_to_ptr.vmem [resolvable:$true] %s338
          %344 = dma.hbm_to_vmem [thread:$0]  %s337, 1024, %s339, [#allocation9], 64, 64, 4
        $region20: #{tpu_custom_call.1} parent=11 // pred_fallthru
          _
        // Predicated region
        $region21: #{tpu_custom_call.1} parent=11 // pred_check
          %p345 = pneg %p171
        $region22: #{tpu_custom_call.1} parent=11 // pred_check_branch
          %347 = sbr.rel (%p345) target = $region24
        $region23: #{tpu_custom_call.1} parent=11 // pred_region
          %349 = vsyncadd [#allocation12], 0
          %s350 = sshll.u32 %s5, 4
          %s351 = int_to_ptr.hbm [resolvable:$true] %s350
          %s352 = sshll.u32 [#allocation11], 4
          %s353 = int_to_ptr.vmem [resolvable:$true] %s352
          %358 = dma.hbm_to_vmem [thread:$0]  %s351, 1024, %s353, [#allocation12], 64, 64, 4
        $region24: #{tpu_custom_call.1} parent=11 // pred_fallthru
          _
        // Predicated region
        $region25: #{tpu_custom_call.1} parent=11 // pred_check
          %p359 = pneg %p192
        $region26: #{tpu_custom_call.1} parent=11 // pred_check_branch
          %361 = sbr.rel (%p359) target = $region28
        $region27: #{tpu_custom_call.1} parent=11 // pred_region
          %363 = vsyncadd [#allocation12], 0
          %s364 = sshll.u32 %s6, 4
          %s365 = int_to_ptr.hbm [resolvable:$true] %s364
          %s366 = sshll.u32 [#allocation13], 4
          %s367 = int_to_ptr.vmem [resolvable:$true] %s366
          %372 = dma.hbm_to_vmem [thread:$0]  %s365, 128, %s367, [#allocation12], 64, 64, 4
        $region28: #{tpu_custom_call.1} parent=11 // pred_fallthru
          _
        // Predicated region
        $region29: #{tpu_custom_call.1} parent=11 // pred_check
          %p373 = pneg %p213
        $region30: #{tpu_custom_call.1} parent=11 // pred_check_branch
          %375 = sbr.rel (%p373) target = $region32
        $region31: #{tpu_custom_call.1} parent=11 // pred_region
          %377 = vsyncadd [#allocation15], 0
          %s378 = sshll.u32 %s7, 4
          %s379 = int_to_ptr.hbm [resolvable:$true] %s378
          %s380 = sshll.u32 [#allocation14], 4
          %s381 = int_to_ptr.vmem [resolvable:$true] %s380
          %386 = dma.hbm_to_vmem [thread:$0]  %s379, 1024, %s381, [#allocation15], 64, 64, 4
        $region32: #{tpu_custom_call.1} parent=11 // pred_fallthru
          _
        // Predicated region
        $region33: #{tpu_custom_call.1} parent=11 // pred_check
          %p387 = pneg %p234
        $region34: #{tpu_custom_call.1} parent=11 // pred_check_branch
          %389 = sbr.rel (%p387) target = $region36
        $region35: #{tpu_custom_call.1} parent=11 // pred_region
          %391 = vsyncadd [#allocation15], 0
          %s392 = sshll.u32 %s8, 4
          %s393 = int_to_ptr.hbm [resolvable:$true] %s392
          %s394 = sshll.u32 [#allocation16], 4
          %s395 = int_to_ptr.vmem [resolvable:$true] %s394
          %400 = dma.hbm_to_vmem [thread:$0]  %s393, 1024, %s395, [#allocation15], 64, 64, 4
        $region36: #{tpu_custom_call.1} parent=11 // pred_fallthru
          _
        // Predicated region
        $region37: #{tpu_custom_call.1} parent=11 // pred_check
          %p401 = pneg %p255
        $region38: #{tpu_custom_call.1} parent=11 // pred_check_branch
          %403 = sbr.rel (%p401) target = $region40
        $region39: #{tpu_custom_call.1} parent=11 // pred_region
          %405 = vsyncadd [#allocation18], 0
          %s406 = sshll.u32 %s9, 4
          %s407 = int_to_ptr.hbm [resolvable:$true] %s406
          %s408 = sshll.u32 [#allocation17], 4
          %s409 = int_to_ptr.vmem [resolvable:$true] %s408
          %414 = dma.hbm_to_vmem [thread:$0]  %s407, 1024, %s409, [#allocation18], 64, 64, 4
        $region40: #{tpu_custom_call.1} parent=11 // pred_fallthru
          _
        // Predicated region
        $region41: #{tpu_custom_call.1} parent=11 // pred_check
          %p415 = pneg %p276
        $region42: #{tpu_custom_call.1} parent=11 // pred_check_branch
          %417 = sbr.rel (%p415) target = $region44
        $region43: #{tpu_custom_call.1} parent=11 // pred_region
          _
        $region44: #{tpu_custom_call.1} parent=11 // pred_fallthru
          _
      $region12: #{tpu_custom_call.1} parent=5 // pred_fallthru
        _
      %p418 = scmp.lt.s32.totalorder %s30, 2
      // Predicated region
      $region45: #{tpu_custom_call.1} parent=5 // pred_check
        %p419 = pneg %p418
      $region46: #{tpu_custom_call.1} parent=5 // pred_check_branch
        %421 = sbr.rel (%p419) target = $region48
      $region47: #{tpu_custom_call.1} parent=5 // pred_region
        // Predicated region
        $region49: #{tpu_custom_call.1} parent=47 // pred_check
          %p422 = pneg %p50
        $region50: #{tpu_custom_call.1} parent=47 // pred_check_branch
          %424 = sbr.rel (%p422) target = $region52
        $region51: #{tpu_custom_call.1} parent=47 // pred_region
          %s425 = sand.u32 %s40, 1
          %s426 = scalar_lea.sflag [#allocation3], %s425
          %s427 = sand.u32 %s40, 1
          %s428 = smul.addr %s427, 4
          %s429 = scalar_lea.vmem [#allocation2], %s428
          %431 = vsyncadd %s426, 0
          %s432 = smul.addr %s30, 4
          %s433 = scalar_lea.hbm %s0, %s432
          %s435 = sshll.u32 %s433, 4
          %s436 = int_to_ptr.hbm [resolvable:$true] %s435
          %s437 = sshll.u32 %s429, 4
          %s438 = int_to_ptr.vmem [resolvable:$true] %s437
          %440 = dma.hbm_to_vmem [thread:$0]  %s436, 64, %s438, %s426
        $region52: #{tpu_custom_call.1} parent=47 // pred_fallthru
          _
        // Predicated region
        $region53: #{tpu_custom_call.1} parent=47 // pred_check
          %p441 = pneg %p76
        $region54: #{tpu_custom_call.1} parent=47 // pred_check_branch
          %443 = sbr.rel (%p441) target = $region56
        $region55: #{tpu_custom_call.1} parent=47 // pred_region
          %s444 = sand.u32 %s30, 1
          %s445 = scalar_lea.sflag [#allocation6], %s444
          %s446 = sand.u32 %s66, 1
          %s447 = smul.addr %s446, 4
          %s448 = scalar_lea.vmem [#allocation5], %s447
          %450 = vsyncadd %s445, 0
          %s451 = smul.addr %s30, 4
          %s452 = scalar_lea.hbm %s1, %s451
          %s454 = sshll.u32 %s452, 4
          %s455 = int_to_ptr.hbm [resolvable:$true] %s454
          %s456 = sshll.u32 %s448, 4
          %s457 = int_to_ptr.vmem [resolvable:$true] %s456
          %459 = dma.hbm_to_vmem [thread:$0]  %s455, 64, %s457, %s445
        $region56: #{tpu_custom_call.1} parent=47 // pred_fallthru
          _
        // Predicated region
        $region57: #{tpu_custom_call.1} parent=47 // pred_check
          %p460 = pneg %p102
        $region58: #{tpu_custom_call.1} parent=47 // pred_check_branch
          %462 = sbr.rel (%p460) target = $region60
        $region59: #{tpu_custom_call.1} parent=47 // pred_region
          %s463 = sand.u32 %s30, 1
          %s464 = scalar_lea.sflag [#allocation6], %s463
          %s465 = sand.u32 %s92, 1
          %s466 = smul.addr %s465, 8
          %s467 = scalar_lea.vmem [#allocation7], %s466
          %469 = vsyncadd %s464, 0
          %s470 = smul.addr %s30, 8
          %s471 = scalar_lea.hbm %s2, %s470
          %s473 = sshll.u32 %s471, 4
          %s474 = int_to_ptr.hbm [resolvable:$true] %s473
          %s475 = sshll.u32 %s467, 4
          %s476 = int_to_ptr.vmem [resolvable:$true] %s475
          %478 = dma.hbm_to_vmem [thread:$0]  %s474, 128, %s476, %s464
        $region60: #{tpu_custom_call.1} parent=47 // pred_fallthru
          _
      $region48: #{tpu_custom_call.1} parent=5 // pred_fallthru
        _
      %p479 = scmp.le.s32.totalorder 1, %s30
      %p480 = scmp.lt.s32.totalorder %s30, 3
      %p481 = pnand %p479, %p480
      %p482 = pneg %p481
      // Predicated region
      $region61: #{tpu_custom_call.1} parent=5 // pred_check
        _
      $region62: #{tpu_custom_call.1} parent=5 // pred_check_branch
        %484 = sbr.rel (%p481) target = $region64
      $region63: #{tpu_custom_call.1} parent=5 // pred_region
        %s485 = ssub.s32 %s30, 1
        %s486 = sand.u32 %s43, 1
        %s487 = scalar_lea.sflag [#allocation3], %s486
        %s488 = sand.u32 %s43, 1
        %s489 = smul.addr %s488, 4
        %s490 = scalar_lea.vmem [#allocation2], %s489
        // Predicated region
        $region65: #{tpu_custom_call.1} parent=63 // pred_check
          %p491 = pneg %p56
        $region66: #{tpu_custom_call.1} parent=63 // pred_check_branch
          %493 = sbr.rel (%p491) target = $region68
        $region67: #{tpu_custom_call.1} parent=63 // pred_region
          %495 = dma.done %s487, 64
        $region68: #{tpu_custom_call.1} parent=63 // pred_fallthru
          _
        %s496 = sand.u32 %s35, 1
        %s497 = scalar_lea.sflag [#allocation6], %s496
        %s498 = sand.u32 %s69, 1
        %s499 = smul.addr %s498, 4
        %s500 = scalar_lea.vmem [#allocation5], %s499
        // Predicated region
        $region69: #{tpu_custom_call.1} parent=63 // pred_check
          %p501 = pneg %p82
        $region70: #{tpu_custom_call.1} parent=63 // pred_check_branch
          %503 = sbr.rel (%p501) target = $region72
        $region71: #{tpu_custom_call.1} parent=63 // pred_region
          %505 = dma.done %s497, 64
        $region72: #{tpu_custom_call.1} parent=63 // pred_fallthru
          _
        %s506 = sand.u32 %s35, 1
        %s507 = scalar_lea.sflag [#allocation6], %s506
        %s508 = sand.u32 %s95, 1
        %s509 = smul.addr %s508, 8
        %s510 = scalar_lea.vmem [#allocation7], %s509
        // Predicated region
        $region73: #{tpu_custom_call.1} parent=63 // pred_check
          %p511 = pneg %p108
        $region74: #{tpu_custom_call.1} parent=63 // pred_check_branch
          %513 = sbr.rel (%p511) target = $region76
        $region75: #{tpu_custom_call.1} parent=63 // pred_region
          %515 = dma.done %s507, 128
        $region76: #{tpu_custom_call.1} parent=63 // pred_fallthru
          _
        // Predicated region
        $region77: #{tpu_custom_call.1} parent=63 // pred_check
          %p516 = pneg %p129
        $region78: #{tpu_custom_call.1} parent=63 // pred_check_branch
          %518 = sbr.rel (%p516) target = $region80
        $region79: #{tpu_custom_call.1} parent=63 // pred_region
          %520 = dma.done [#allocation9], 192
        $region80: #{tpu_custom_call.1} parent=63 // pred_fallthru
          _
        // Predicated region
        $region81: #{tpu_custom_call.1} parent=63 // pred_check
          %p521 = pneg %p150
        $region82: #{tpu_custom_call.1} parent=63 // pred_check_branch
          %523 = sbr.rel (%p521) target = $region84
        $region83: #{tpu_custom_call.1} parent=63 // pred_region
          %525 = dma.done [#allocation9], 1024
        $region84: #{tpu_custom_call.1} parent=63 // pred_fallthru
          _
        // Predicated region
        $region85: #{tpu_custom_call.1} parent=63 // pred_check
          %p526 = pneg %p171
        $region86: #{tpu_custom_call.1} parent=63 // pred_check_branch
          %528 = sbr.rel (%p526) target = $region88
        $region87: #{tpu_custom_call.1} parent=63 // pred_region
          %530 = dma.done [#allocation12], 1024
        $region88: #{tpu_custom_call.1} parent=63 // pred_fallthru
          _
        // Predicated region
        $region89: #{tpu_custom_call.1} parent=63 // pred_check
          %p531 = pneg %p192
        $region90: #{tpu_custom_call.1} parent=63 // pred_check_branch
          %533 = sbr.rel (%p531) target = $region92
        $region91: #{tpu_custom_call.1} parent=63 // pred_region
          %535 = dma.done [#allocation12], 128
        $region92: #{tpu_custom_call.1} parent=63 // pred_fallthru
          _
        // Predicated region
        $region93: #{tpu_custom_call.1} parent=63 // pred_check
          %p536 = pneg %p213
        $region94: #{tpu_custom_call.1} parent=63 // pred_check_branch
          %538 = sbr.rel (%p536) target = $region96
        $region95: #{tpu_custom_call.1} parent=63 // pred_region
          %540 = dma.done [#allocation15], 1024
        $region96: #{tpu_custom_call.1} parent=63 // pred_fallthru
          _
        // Predicated region
        $region97: #{tpu_custom_call.1} parent=63 // pred_check
          %p541 = pneg %p234
        $region98: #{tpu_custom_call.1} parent=63 // pred_check_branch
          %543 = sbr.rel (%p541) target = $region100
        $region99: #{tpu_custom_call.1} parent=63 // pred_region
          %545 = dma.done [#allocation15], 1024
        $region100: #{tpu_custom_call.1} parent=63 // pred_fallthru
          _
        // Predicated region
        $region101: #{tpu_custom_call.1} parent=63 // pred_check
          %p546 = pneg %p255
        $region102: #{tpu_custom_call.1} parent=63 // pred_check_branch
          %548 = sbr.rel (%p546) target = $region104
        $region103: #{tpu_custom_call.1} parent=63 // pred_region
          %550 = dma.done [#allocation18], 1024
        $region104: #{tpu_custom_call.1} parent=63 // pred_fallthru
          _
        %s551 = sand.u32 %s43, 1
        %s552 = scalar_lea.sflag [#allocation3], %s551
        %s553 = sand.u32 %s43, 1
        %s554 = smul.addr %s553, 4
        %s555 = scalar_lea.vmem [#allocation2], %s554
        %p556 = pneg %p56
        %p557 = pneg %p53
        %s558 = sand.u32 %s35, 1
        %s559 = scalar_lea.sflag [#allocation6], %s558
        %s560 = sand.u32 %s69, 1
        %s561 = smul.addr %s560, 4
        %s562 = scalar_lea.vmem [#allocation5], %s561
        %p563 = pneg %p82
        %p564 = pneg %p79
        %s565 = sand.u32 %s35, 1
        %s566 = scalar_lea.sflag [#allocation6], %s565
        %s567 = sand.u32 %s95, 1
        %s568 = smul.addr %s567, 8
        %s569 = scalar_lea.vmem [#allocation7], %s568
        %p570 = pneg %p108
        %p571 = pneg %p105
        %p572 = pneg %p129
        %p573 = pneg %p126
        %p574 = pneg %p150
        %p575 = pneg %p147
        %p576 = pneg %p171
        %p577 = pneg %p168
        %p578 = pneg %p192
        %p579 = pneg %p189
        %p580 = pneg %p213
        %p581 = pneg %p210
        %p582 = pneg %p234
        %p583 = pneg %p231
        %p584 = pneg %p255
        %p585 = pneg %p252
        %p586 = pneg %p276
        %p587 = pneg %p273
        %p588 = pneg %p302
        %p589 = pneg %p299
        %s590 = sand.u32 %s289, 1
        %s591 = scalar_lea.sflag [#allocation4], %s590
        %s592 = sand.u32 %s289, 1
        %s593 = smul.addr %s592, 16
        %s594 = scalar_lea.vmem [#allocation19], %s593
        %v596 = vld [vmem:[%s490] sm:$0xf]
        %v597 = vld [vmem:[%s500] sm:$0xf]
        %v598 = vld [vmem:[%s510] sm:$0xff]
        %v599 = vld [vmem:[%s10] sm:$0x1]
        %v600 = vld [vmem:[%s10 + $0x1] sm:$0x1]
        %v601 = vld [vmem:[%s10 + $0x2] sm:$0x1]
        %v602 = vld [vmem:[%s10 + $0x3] sm:$0x1]
        %v603 = vld [vmem:[%s10 + $0x4] sm:$0x1]
        %v604 = vld [vmem:[%s10 + $0x5] sm:$0x1]
        %v605 = vld [vmem:[#allocation8] sm:$0xf]
        %v606 = vld [vmem:[#allocation8 + $0x4] sm:$0xf]
        %v607 = vld [vmem:[#allocation8 + $0x8] sm:$0xf]
        %v608 = vperm.slane %v599, 0
        %v612 = vunpack.c.l.b16 %v605
        %v613 = vunpack.c.l.b16 %v606
        %v614 = vunpack.c.l.b16 %v607
        %v615 = vpack.c.b16 %v613, %v612
        %v616 = vpack.c.b16 %v614, %v614
        %vm618 = vcmask 195584
        %v620 = vsel %vm618, %v596, 0
        %vm622 = vcmask 1043456
        %v624 = vsel %vm622, %v616, 0
        %626 = vmatpush.bf16.msra.mxu0 0
        %627 = vmatpush.bf16.msra.mxu0 0
        %628 = vmatpush.bf16.msra.mxu0 0
        %629 = vmatpush.bf16.msra.mxu0 0
        %630 = vmatpush.bf16.msra.mxu0 0
        %631 = vmatpush.bf16.msra.mxu0 0
        %632 = vmatpush.bf16.msra.mxu0 %v624
        %633 = vmatpush.bf16.msra.mxu0 %v615
        %634 = vmatmul.bf16.gmra.mxu0 %v620
        %v635 = vpop.f32.mrf.mxu0
        %v636 = vadd.f32 %v608, %v635
        %v637 = vpop.f32.mrf.mxu0
        %638 = vdwg.mxu0
        %v639 = vmax.f32 %v636, 0.0
        %v640 = vpack.c.bf16 %v639, %v639
        %v641 = vld [vmem:[#allocation10] sm:$0xf]
        %v642 = vld [vmem:[#allocation10 + $0x4] sm:$0xf]
        %v643 = vld [vmem:[#allocation10 + $0x8] sm:$0xf]
        %v644 = vld [vmem:[#allocation10 + $0xc] sm:$0xf]
        %v645 = vld [vmem:[#allocation10 + $0x10] sm:$0xf]
        %v646 = vld [vmem:[#allocation10 + $0x14] sm:$0xf]
        %v647 = vld [vmem:[#allocation10 + $0x18] sm:$0xf]
        %v648 = vld [vmem:[#allocation10 + $0x1c] sm:$0xf]
        %v649 = vld [vmem:[#allocation10 + $0x20] sm:$0xf]
        %v650 = vld [vmem:[#allocation10 + $0x24] sm:$0xf]
        %v651 = vld [vmem:[#allocation10 + $0x28] sm:$0xf]
        %v652 = vld [vmem:[#allocation10 + $0x2c] sm:$0xf]
        %v653 = vld [vmem:[#allocation10 + $0x30] sm:$0xf]
        %v654 = vld [vmem:[#allocation10 + $0x34] sm:$0xf]
        %v655 = vld [vmem:[#allocation10 + $0x38] sm:$0xf]
        %v656 = vld [vmem:[#allocation10 + $0x3c] sm:$0xf]
        %v657 = vperm.slane %v600, 0
        %v674 = vunpack.c.l.b16 %v641
        %v675 = vunpack.c.l.b16 %v642
        %v676 = vunpack.c.l.b16 %v643
        %v677 = vunpack.c.l.b16 %v644
        %v678 = vunpack.c.l.b16 %v645
        %v679 = vunpack.c.l.b16 %v646
        %v680 = vunpack.c.l.b16 %v647
        %v681 = vunpack.c.l.b16 %v648
        %v682 = vunpack.c.l.b16 %v649
        %v683 = vunpack.c.l.b16 %v650
        %v684 = vunpack.c.l.b16 %v651
        %v685 = vunpack.c.l.b16 %v652
        %v686 = vunpack.c.l.b16 %v653
        %v687 = vunpack.c.l.b16 %v654
        %v688 = vunpack.c.l.b16 %v655
        %v689 = vunpack.c.l.b16 %v656
        %v690 = vpack.c.b16 %v675, %v674
        %v691 = vpack.c.b16 %v677, %v676
        %v692 = vpack.c.b16 %v679, %v678
        %v693 = vpack.c.b16 %v681, %v680
        %v694 = vpack.c.b16 %v683, %v682
        %v695 = vpack.c.b16 %v685, %v684
        %v696 = vpack.c.b16 %v687, %v686
        %v697 = vpack.c.b16 %v689, %v688
        %706 = vmatpush.bf16.msra.mxu0 %v697
        %707 = vmatpush.bf16.msra.mxu0 %v696
        %708 = vmatpush.bf16.msra.mxu0 %v695
        %709 = vmatpush.bf16.msra.mxu0 %v694
        %710 = vmatpush.bf16.msra.mxu0 %v693
        %711 = vmatpush.bf16.msra.mxu0 %v692
        %712 = vmatpush.bf16.msra.mxu0 %v691
        %713 = vmatpush.bf16.msra.mxu0 %v690
        %714 = vmatmul.bf16.gmra.mxu0 %v640
        %v715 = vpop.f32.mrf.mxu0
        %v716 = vadd.f32 %v657, %v715
        %v717 = vpop.f32.mrf.mxu0
        %718 = vdwg.mxu0
        %v719 = vmax.f32 %v716, 0.0
        %v720 = vpack.c.bf16 %v719, %v719
        %v721 = vld [vmem:[#allocation11] sm:$0xf]
        %v722 = vld [vmem:[#allocation11 + $0x4] sm:$0xf]
        %v723 = vld [vmem:[#allocation11 + $0x8] sm:$0xf]
        %v724 = vld [vmem:[#allocation11 + $0xc] sm:$0xf]
        %v725 = vld [vmem:[#allocation11 + $0x10] sm:$0xf]
        %v726 = vld [vmem:[#allocation11 + $0x14] sm:$0xf]
        %v727 = vld [vmem:[#allocation11 + $0x18] sm:$0xf]
        %v728 = vld [vmem:[#allocation11 + $0x1c] sm:$0xf]
        %v729 = vld [vmem:[#allocation11 + $0x20] sm:$0xf]
        %v730 = vld [vmem:[#allocation11 + $0x24] sm:$0xf]
        %v731 = vld [vmem:[#allocation11 + $0x28] sm:$0xf]
        %v732 = vld [vmem:[#allocation11 + $0x2c] sm:$0xf]
        %v733 = vld [vmem:[#allocation11 + $0x30] sm:$0xf]
        %v734 = vld [vmem:[#allocation11 + $0x34] sm:$0xf]
        %v735 = vld [vmem:[#allocation11 + $0x38] sm:$0xf]
        %v736 = vld [vmem:[#allocation11 + $0x3c] sm:$0xf]
        %v737 = vperm.slane %v601, 0
        %v754 = vunpack.c.l.b16 %v721
        %v755 = vunpack.c.l.b16 %v722
        %v756 = vunpack.c.l.b16 %v723
        %v757 = vunpack.c.l.b16 %v724
        %v758 = vunpack.c.l.b16 %v725
        %v759 = vunpack.c.l.b16 %v726
        %v760 = vunpack.c.l.b16 %v727
        %v761 = vunpack.c.l.b16 %v728
        %v762 = vunpack.c.l.b16 %v729
        %v763 = vunpack.c.l.b16 %v730
        %v764 = vunpack.c.l.b16 %v731
        %v765 = vunpack.c.l.b16 %v732
        %v766 = vunpack.c.l.b16 %v733
        %v767 = vunpack.c.l.b16 %v734
        %v768 = vunpack.c.l.b16 %v735
        %v769 = vunpack.c.l.b16 %v736
        %v770 = vpack.c.b16 %v755, %v754
        %v771 = vpack.c.b16 %v757, %v756
        %v772 = vpack.c.b16 %v759, %v758
        %v773 = vpack.c.b16 %v761, %v760
        %v774 = vpack.c.b16 %v763, %v762
        %v775 = vpack.c.b16 %v765, %v764
        %v776 = vpack.c.b16 %v767, %v766
        %v777 = vpack.c.b16 %v769, %v768
        %786 = vmatpush.bf16.msra.mxu0 %v777
        %787 = vmatpush.bf16.msra.mxu0 %v776
        %788 = vmatpush.bf16.msra.mxu0 %v775
        %789 = vmatpush.bf16.msra.mxu0 %v774
        %790 = vmatpush.bf16.msra.mxu0 %v773
        %791 = vmatpush.bf16.msra.mxu0 %v772
        %792 = vmatpush.bf16.msra.mxu0 %v771
        %793 = vmatpush.bf16.msra.mxu0 %v770
        %794 = vmatmul.bf16.gmra.mxu0 %v720
        %v795 = vpop.f32.mrf.mxu0
        %v796 = vadd.f32 %v737, %v795
        %v797 = vpop.f32.mrf.mxu0
        %798 = vdwg.mxu0
        %v799 = vlaneseq
        %v800 = vand.u32 %v799, 127
        %v801 = vmax.f32 %v796, -4.0
        %v802 = vmin.f32 %v801, 15.0
        %v803 = vmul.f32 %v802, 1.442695
        %v804 = vpow.pop %v803
        %vm805 = vcmp.lt.s32.totalorder %v800, 16
        %vm806 = vcmp.lt.s32.totalorder %v800, 32
        %v807 = vsel %vm806, %v804, 0.0
        %v808 = vsel %vm805, %v796, %v807
        %v809 = vmul.f32 %v808, %v598
        %v810 = vpack.c.bf16 %v809, %v809
        %v811 = vld [vmem:[#allocation13] sm:$0xf]
        %v812 = vld [vmem:[#allocation13 + $0x4] sm:$0xf]
        %v813 = vld [vmem:[#allocation14] sm:$0xf]
        %v814 = vld [vmem:[#allocation14 + $0x4] sm:$0xf]
        %v815 = vld [vmem:[#allocation14 + $0x8] sm:$0xf]
        %v816 = vld [vmem:[#allocation14 + $0xc] sm:$0xf]
        %v817 = vld [vmem:[#allocation14 + $0x10] sm:$0xf]
        %v818 = vld [vmem:[#allocation14 + $0x14] sm:$0xf]
        %v819 = vld [vmem:[#allocation14 + $0x18] sm:$0xf]
        %v820 = vld [vmem:[#allocation14 + $0x1c] sm:$0xf]
        %v821 = vld [vmem:[#allocation14 + $0x20] sm:$0xf]
        %v822 = vld [vmem:[#allocation14 + $0x24] sm:$0xf]
        %v823 = vld [vmem:[#allocation14 + $0x28] sm:$0xf]
        %v824 = vld [vmem:[#allocation14 + $0x2c] sm:$0xf]
        %v825 = vld [vmem:[#allocation14 + $0x30] sm:$0xf]
        %v826 = vld [vmem:[#allocation14 + $0x34] sm:$0xf]
        %v827 = vld [vmem:[#allocation14 + $0x38] sm:$0xf]
        %v828 = vld [vmem:[#allocation14 + $0x3c] sm:$0xf]
        %v845 = vunpack.c.l.b16 %v813
        %v846 = vunpack.c.l.b16 %v814
        %v847 = vunpack.c.l.b16 %v815
        %v848 = vunpack.c.l.b16 %v816
        %v849 = vunpack.c.l.b16 %v817
        %v850 = vunpack.c.l.b16 %v818
        %v851 = vunpack.c.l.b16 %v819
        %v852 = vunpack.c.l.b16 %v820
        %v853 = vunpack.c.l.b16 %v821
        %v854 = vunpack.c.l.b16 %v822
        %v855 = vunpack.c.l.b16 %v823
        %v856 = vunpack.c.l.b16 %v824
        %v857 = vunpack.c.l.b16 %v825
        %v858 = vunpack.c.l.b16 %v826
        %v859 = vunpack.c.l.b16 %v827
        %v860 = vunpack.c.l.b16 %v828
        %v861 = vpack.c.b16 %v846, %v845
        %v862 = vpack.c.b16 %v848, %v847
        %v863 = vpack.c.b16 %v850, %v849
        %v864 = vpack.c.b16 %v852, %v851
        %v865 = vpack.c.b16 %v854, %v853
        %v866 = vpack.c.b16 %v856, %v855
        %v867 = vpack.c.b16 %v858, %v857
        %v868 = vpack.c.b16 %v860, %v859
        %877 = vmatpush.bf16.msra.mxu0 %v868
        %878 = vmatpush.bf16.msra.mxu0 %v867
        %879 = vmatpush.bf16.msra.mxu0 %v866
        %880 = vmatpush.bf16.msra.mxu0 %v865
        %881 = vmatpush.bf16.msra.mxu0 %v864
        %882 = vmatpush.bf16.msra.mxu0 %v863
        %883 = vmatpush.bf16.msra.mxu0 %v862
        %884 = vmatpush.bf16.msra.mxu0 %v861
        %885 = vmatmul.bf16.gmra.mxu0 %v810
        %v886 = vpop.f32.mrf.mxu0
        %v887 = vadd.f32 0.0, %v886
        %v888 = vpop.f32.mrf.mxu0
        %889 = vdwg.mxu0
        %v892 = vunpack.c.l.b16 %v811
        %v893 = vunpack.c.l.b16 %v812
        %v894 = vpack.c.b16 %v893, %v892
        %vm896 = vcmask 130048
        %v898 = vsel %vm896, %v597, 0
        %900 = vmatpush.bf16.msra.mxu0 0
        %901 = vmatpush.bf16.msra.mxu0 0
        %902 = vmatpush.bf16.msra.mxu0 0
        %903 = vmatpush.bf16.msra.mxu0 0
        %904 = vmatpush.bf16.msra.mxu0 0
        %905 = vmatpush.bf16.msra.mxu0 0
        %906 = vmatpush.bf16.msra.mxu0 0
        %907 = vmatpush.bf16.msra.mxu0 %v894
        %908 = vmatmul.bf16.gmra.mxu0 %v898
        %v909 = vpop.f32.mrf.mxu0
        %v910 = vadd.f32 %v887, %v909
        %v911 = vpop.f32.mrf.mxu0
        %912 = vdwg.mxu0
        %v913 = vperm.slane %v602, 0
        %v914 = vadd.f32 %v910, %v913
        %v915 = vmax.f32 %v914, 0.0
        %v916 = vpack.c.bf16 %v915, %v915
        %v917 = vld [vmem:[#allocation16] sm:$0xf]
        %v918 = vld [vmem:[#allocation16 + $0x4] sm:$0xf]
        %v919 = vld [vmem:[#allocation16 + $0x8] sm:$0xf]
        %v920 = vld [vmem:[#allocation16 + $0xc] sm:$0xf]
        %v921 = vld [vmem:[#allocation16 + $0x10] sm:$0xf]
        %v922 = vld [vmem:[#allocation16 + $0x14] sm:$0xf]
        %v923 = vld [vmem:[#allocation16 + $0x18] sm:$0xf]
        %v924 = vld [vmem:[#allocation16 + $0x1c] sm:$0xf]
        %v925 = vld [vmem:[#allocation16 + $0x20] sm:$0xf]
        %v926 = vld [vmem:[#allocation16 + $0x24] sm:$0xf]
        %v927 = vld [vmem:[#allocation16 + $0x28] sm:$0xf]
        %v928 = vld [vmem:[#allocation16 + $0x2c] sm:$0xf]
        %v929 = vld [vmem:[#allocation16 + $0x30] sm:$0xf]
        %v930 = vld [vmem:[#allocation16 + $0x34] sm:$0xf]
        %v931 = vld [vmem:[#allocation16 + $0x38] sm:$0xf]
        %v932 = vld [vmem:[#allocation16 + $0x3c] sm:$0xf]
        %v933 = vperm.slane %v603, 0
        %v950 = vunpack.c.l.b16 %v917
        %v951 = vunpack.c.l.b16 %v918
        %v952 = vunpack.c.l.b16 %v919
        %v953 = vunpack.c.l.b16 %v920
        %v954 = vunpack.c.l.b16 %v921
        %v955 = vunpack.c.l.b16 %v922
        %v956 = vunpack.c.l.b16 %v923
        %v957 = vunpack.c.l.b16 %v924
        %v958 = vunpack.c.l.b16 %v925
        %v959 = vunpack.c.l.b16 %v926
        %v960 = vunpack.c.l.b16 %v927
        %v961 = vunpack.c.l.b16 %v928
        %v962 = vunpack.c.l.b16 %v929
        %v963 = vunpack.c.l.b16 %v930
        %v964 = vunpack.c.l.b16 %v931
        %v965 = vunpack.c.l.b16 %v932
        %v966 = vpack.c.b16 %v951, %v950
        %v967 = vpack.c.b16 %v953, %v952
        %v968 = vpack.c.b16 %v955, %v954
        %v969 = vpack.c.b16 %v957, %v956
        %v970 = vpack.c.b16 %v959, %v958
        %v971 = vpack.c.b16 %v961, %v960
        %v972 = vpack.c.b16 %v963, %v962
        %v973 = vpack.c.b16 %v965, %v964
        %982 = vmatpush.bf16.msra.mxu0 %v973
        %983 = vmatpush.bf16.msra.mxu0 %v972
        %984 = vmatpush.bf16.msra.mxu0 %v971
        %985 = vmatpush.bf16.msra.mxu0 %v970
        %986 = vmatpush.bf16.msra.mxu0 %v969
        %987 = vmatpush.bf16.msra.mxu0 %v968
        %988 = vmatpush.bf16.msra.mxu0 %v967
        %989 = vmatpush.bf16.msra.mxu0 %v966
        %990 = vmatmul.bf16.gmra.mxu0 %v916
        %v991 = vpop.f32.mrf.mxu0
        %v992 = vadd.f32 %v933, %v991
        %v993 = vpop.f32.mrf.mxu0
        %994 = vdwg.mxu0
        %v995 = vmax.f32 %v992, 0.0
        %v996 = vpack.c.bf16 %v995, %v995
        %v997 = vld [vmem:[#allocation17] sm:$0xf]
        %v998 = vld [vmem:[#allocation17 + $0x4] sm:$0xf]
        %v999 = vld [vmem:[#allocation17 + $0x8] sm:$0xf]
        %v1000 = vld [vmem:[#allocation17 + $0xc] sm:$0xf]
        %v1001 = vld [vmem:[#allocation17 + $0x10] sm:$0xf]
        %v1002 = vld [vmem:[#allocation17 + $0x14] sm:$0xf]
        %v1003 = vld [vmem:[#allocation17 + $0x18] sm:$0xf]
        %v1004 = vld [vmem:[#allocation17 + $0x1c] sm:$0xf]
        %v1005 = vld [vmem:[#allocation17 + $0x20] sm:$0xf]
        %v1006 = vld [vmem:[#allocation17 + $0x24] sm:$0xf]
        %v1007 = vld [vmem:[#allocation17 + $0x28] sm:$0xf]
        %v1008 = vld [vmem:[#allocation17 + $0x2c] sm:$0xf]
        %v1009 = vld [vmem:[#allocation17 + $0x30] sm:$0xf]
        %v1010 = vld [vmem:[#allocation17 + $0x34] sm:$0xf]
        %v1011 = vld [vmem:[#allocation17 + $0x38] sm:$0xf]
        %v1012 = vld [vmem:[#allocation17 + $0x3c] sm:$0xf]
        %v1013 = vperm.slane %v604, 0
        %v1030 = vunpack.c.l.b16 %v997
        %v1031 = vunpack.c.l.b16 %v998
        %v1032 = vunpack.c.l.b16 %v999
        %v1033 = vunpack.c.l.b16 %v1000
        %v1034 = vunpack.c.l.b16 %v1001
        %v1035 = vunpack.c.l.b16 %v1002
        %v1036 = vunpack.c.l.b16 %v1003
        %v1037 = vunpack.c.l.b16 %v1004
        %v1038 = vunpack.c.l.b16 %v1005
        %v1039 = vunpack.c.l.b16 %v1006
        %v1040 = vunpack.c.l.b16 %v1007
        %v1041 = vunpack.c.l.b16 %v1008
        %v1042 = vunpack.c.l.b16 %v1009
        %v1043 = vunpack.c.l.b16 %v1010
        %v1044 = vunpack.c.l.b16 %v1011
        %v1045 = vunpack.c.l.b16 %v1012
        %v1046 = vpack.c.b16 %v1031, %v1030
        %v1047 = vpack.c.b16 %v1033, %v1032
        %v1048 = vpack.c.b16 %v1035, %v1034
        %v1049 = vpack.c.b16 %v1037, %v1036
        %v1050 = vpack.c.b16 %v1039, %v1038
        %v1051 = vpack.c.b16 %v1041, %v1040
        %v1052 = vpack.c.b16 %v1043, %v1042
        %v1053 = vpack.c.b16 %v1045, %v1044
        %1062 = vmatpush.bf16.msra.mxu0 %v1053
        %1063 = vmatpush.bf16.msra.mxu0 %v1052
        %1064 = vmatpush.bf16.msra.mxu0 %v1051
        %1065 = vmatpush.bf16.msra.mxu0 %v1050
        %1066 = vmatpush.bf16.msra.mxu0 %v1049
        %1067 = vmatpush.bf16.msra.mxu0 %v1048
        %1068 = vmatpush.bf16.msra.mxu0 %v1047
        %1069 = vmatpush.bf16.msra.mxu0 %v1046
        %1070 = vmatmul.bf16.gmra.mxu0 %v996
        %v1071 = vpop.f32.mrf.mxu0
        %v1072 = vadd.f32 %v1013, %v1071
        %v1073 = vpop.f32.mrf.mxu0
        %1074 = vdwg.mxu0
        %v1075 = vtanh.pop %v1072
        %1076 = vst [vmem:[%s594] sm:$0xff] %v1075
        %1077 = vst [vmem:[%s594 + $0x8] sm:$0xff] %v808
        %s1078 = sand.u32 %s289, 1
        %s1079 = scalar_lea.sflag [#allocation4], %s1078
        %s1080 = sand.u32 %s289, 1
        %s1081 = smul.addr %s1080, 16
        %s1082 = scalar_lea.vmem [#allocation19], %s1081
        // Predicated region
        $region105: #{tpu_custom_call.1} parent=63 // pred_check
          %p1083 = pneg %p299
        $region106: #{tpu_custom_call.1} parent=63 // pred_check_branch
          %1085 = sbr.rel (%p1083) target = $region108
        $region107: #{tpu_custom_call.1} parent=63 // pred_region
          %1087 = vsyncadd %s1079, 0
          %s1088 = smul.addr %s35, 2
          %s1089 = smul.addr %s1088, 8
          %s1090 = scalar_lea.hbm %s11, %s1089
          %s1092 = sshll.u32 %s1082, 4
          %s1093 = int_to_ptr.vmem [resolvable:$true] %s1092
          %s1094 = sshll.u32 %s1090, 4
          %s1095 = int_to_ptr.hbm [resolvable:$true] %s1094
          %1097 = dma.vmem_to_hbm [thread:$0]  %s1093, 256, %s1095, %s1079
        $region108: #{tpu_custom_call.1} parent=63 // pred_fallthru
          _
      $region64: #{tpu_custom_call.1} parent=5 // pred_fallthru
        _
      %p1098 = scmp.le.s32.totalorder 2, %s30
      // Predicated region
      $region109: #{tpu_custom_call.1} parent=5 // pred_check
        %p1099 = pneg %p1098
      $region110: #{tpu_custom_call.1} parent=5 // pred_check_branch
        %1101 = sbr.rel (%p1099) target = $region112
      $region111: #{tpu_custom_call.1} parent=5 // pred_region
        %s1102 = ssub.s32 %s30, 2
        // Predicated region
        $region113: #{tpu_custom_call.1} parent=111 // pred_check
          %p1103 = pneg %p305
        $region114: #{tpu_custom_call.1} parent=111 // pred_check_branch
          %1105 = sbr.rel (%p1103) target = $region116
        $region115: #{tpu_custom_call.1} parent=111 // pred_region
          %s1106 = sand.u32 %s290, 1
          %s1107 = scalar_lea.sflag [#allocation4], %s1106
          %s1108 = sand.u32 %s290, 1
          %s1109 = smul.addr %s1108, 16
          %s1110 = scalar_lea.vmem [#allocation19], %s1109
          %1112 = dma.done %s1107, 256
        $region116: #{tpu_custom_call.1} parent=111 // pred_fallthru
          _
      $region112: #{tpu_custom_call.1} parent=5 // pred_fallthru
        _
    $region6: #{tpu_custom_call.1} parent=1 // loop_footer
      %s34 = sadd.s32 1, %s30
    $region7: #{tpu_custom_call.1} parent=1 // loop_footer_branch
      %29 = sbr.rel target = $region3
    $region8: #{tpu_custom_call.1} parent=1 // loop_exit
      _
    %1113 = vsyncpa [#allocation3], 1
    %s1114 = scalar_lea.sflag [#allocation3], 1
    %1115 = vsyncpa %s1114, 1
    %1116 = vsyncpa [#allocation6], 1
    %s1117 = scalar_lea.sflag [#allocation6], 1
    %1118 = vsyncpa %s1117, 1
    %1119 = vsyncpa [#allocation9], 1
    %1120 = vsyncpa [#allocation12], 1
    %1121 = vsyncpa [#allocation15], 1
    %1122 = vsyncpa [#allocation18], 1
    %1123 = vsyncpa [#allocation4], 1
    %s1124 = scalar_lea.sflag [#allocation4], 1
    %1125 = vsyncpa %s1124, 1

// kernel: tpu_custom_call.1
$region0: #{tpu_custom_call.1}
  #allocation0 [shape = 'u32[]', space=smem, size = 0x4, offset = 0x4, fixed_abs, tag = 'smem constant byte address 0x4 - core index']
  #allocation1 [shape = 'u32[72,128]{1,0:T(1,128)}', space=vmem, size = 0x9000, scoped, tag = 'internal scratch']
  %s0 = inlined_call_operand.hbm [shape: bf16[16,24], index: 0, kind: input, shape index: {}]
  %s1 = inlined_call_operand.hbm [shape: bf16[16,16], index: 1, kind: input, shape index: {}]
  %s2 = inlined_call_operand.hbm [shape: f32[16,128], index: 2, kind: input, shape index: {}]
  %s3 = inlined_call_operand.hbm [shape: bf16[24,128], index: 3, kind: input, shape index: {}]
  %s4 = inlined_call_operand.hbm [shape: bf16[128,128], index: 4, kind: input, shape index: {}]
  %s5 = inlined_call_operand.hbm [shape: bf16[128,128], index: 5, kind: input, shape index: {}]
  %s6 = inlined_call_operand.hbm [shape: bf16[16,128], index: 6, kind: input, shape index: {}]
  %s7 = inlined_call_operand.hbm [shape: bf16[128,128], index: 7, kind: input, shape index: {}]
  %s8 = inlined_call_operand.hbm [shape: bf16[128,128], index: 8, kind: input, shape index: {}]
  %s9 = inlined_call_operand.hbm [shape: bf16[128,128], index: 9, kind: input, shape index: {}]
  %s10 = inlined_call_operand.vmem [shape: f32[8,128], index: 10, kind: input, shape index: {}]
  %s11 = inlined_call_operand.hbm [shape: f32[16,256], index: 11, kind: output, shape index: {}]
  %s12 = sld [smem:[#allocation0]]
  $region117: #{tpu_custom_call.1} parent=0
    _
  %s14 = ssub.s32 1, %s12
  %s15 = scalar_select 0, %s14, %s12
  $region1: #{tpu_custom_call.1} parent=0
    #allocation2 [shape = 'u8[4096]{0}', space=vmem, size = 0x1000, scoped, tag = 'input window, operand 0']
    #allocation3 [shape = 's32[2]{0}', space=sflag, size = 0x8, scoped, tag = 'scoped memory for tpu_custom_call.1']
    #allocation4 [shape = 's32[2]{0}', space=sflag, size = 0x8, scoped, tag = 'scoped memory for tpu_custom_call.1']
    #allocation5 [shape = 'u8[4096]{0}', space=vmem, size = 0x1000, scoped, tag = 'input window, operand 1']
    #allocation6 [shape = 's32[2]{0}', space=sflag, size = 0x8, scoped, tag = 'scoped memory for tpu_custom_call.1']
    #allocation7 [shape = 'u8[8192]{0}', space=vmem, size = 0x2000, scoped, tag = 'input window, operand 2']
    #allocation8 [shape = 'u8[6144]{0}', space=vmem, size = 0x1800, scoped, tag = 'input window, operand 3, single buffered']
    #allocation9 [shape = 's32[1]{0}', space=sflag, size = 0x4, scoped, tag = 'scoped memory for tpu_custom_call.1']
    #allocation10 [shape = 'u8[32768]{0}', space=vmem, size = 0x8000, scoped, tag = 'input window, operand 4, single buffered']
    #allocation11 [shape = 'u8[32768]{0}', space=vmem, size = 0x8000, scoped, tag = 'input window, operand 5, single buffered']
    #allocation12 [shape = 's32[1]{0}', space=sflag, size = 0x4, scoped, tag = 'scoped memory for tpu_custom_call.1']
    #allocation13 [shape = 'u8[4096]{0}', space=vmem, size = 0x1000, scoped, tag = 'input window, operand 6, single buffered']
    #allocation14 [shape = 'u8[32768]{0}', space=vmem, size = 0x8000, scoped, tag = 'input window, operand 7, single buffered']
    #allocation15 [shape = 's32[1]{0}', space=sflag, size = 0x4, scoped, tag = 'scoped memory for tpu_custom_call.1']
    #allocation16 [shape = 'u8[32768]{0}', space=vmem, size = 0x8000, scoped, tag = 'input window, operand 8, single buffered']
    #allocation17 [shape = 'u8[32768]{0}', space=vmem, size = 0x8000, scoped, tag = 'input window, operand 9, single buffered']
    #allocation18 [shape = 's32[1]{0}', space=sflag, size = 0x4, scoped, tag = 'scoped memory for tpu_custom_call.1']
    #allocation19 [shape = 'u8[16384]{0}', space=vmem, size = 0x4000, scoped, tag = 'output window, operand 0']
    %16 = vsyncpa [#allocation3], 0
    %s17 = scalar_lea.sflag [#allocation3], 1
    %18 = vsyncpa %s17, 0
    %19 = vsyncpa [#allocation6], 0
    %s20 = scalar_lea.sflag [#allocation6], 1
    %21 = vsyncpa %s20, 0
    %22 = vsyncpa [#allocation9], 0
    %23 = vsyncpa [#allocation12], 0
    %24 = vsyncpa [#allocation15], 0
    %25 = vsyncpa [#allocation18], 0
    %26 = vsyncpa [#allocation4], 0
    %s27 = scalar_lea.sflag [#allocation4], 1
    %28 = vsyncpa %s27, 0
    loop: start=0, step=1, limit=4
    $region2: #{tpu_custom_call.1} parent=1 // loop_pre_header
      _
    $region3: #{tpu_custom_call.1} parent=1 // loop_header
      %s30 = sphi 0, %s34
      %p31 = scmp.ge.s32.totalorder %s30, 4
      %s40 = sphi 0, %s42
      %s43 = sphi 0, %s40
      %s44 = sphi 0, %s43
      %s60 = sphi 0, %s44
      %s66 = sphi 0, %s68
      %s69 = sphi 0, %s66
      %s70 = sphi 0, %s69
      %s86 = sphi 0, %s70
      %s92 = sphi 0, %s94
      %s95 = sphi 0, %s92
      %s96 = sphi 0, %s95
      %s112 = sphi 0, %s96
      %s116 = sphi 0, %s116
      %s118 = sphi 0, %s116
      %s119 = sphi 0, %s118
      %s133 = sphi 0, %s119
      %s137 = sphi 0, %s137
      %s139 = sphi 0, %s137
      %s140 = sphi 0, %s139
      %s154 = sphi 0, %s140
      %s158 = sphi 0, %s158
      %s160 = sphi 0, %s158
      %s161 = sphi 0, %s160
      %s175 = sphi 0, %s161
      %s179 = sphi 0, %s179
      %s181 = sphi 0, %s179
      %s182 = sphi 0, %s181
      %s196 = sphi 0, %s182
      %s200 = sphi 0, %s200
      %s202 = sphi 0, %s200
      %s203 = sphi 0, %s202
      %s217 = sphi 0, %s203
      %s221 = sphi 0, %s221
      %s223 = sphi 0, %s221
      %s224 = sphi 0, %s223
      %s238 = sphi 0, %s224
      %s242 = sphi 0, %s242
      %s244 = sphi 0, %s242
      %s245 = sphi 0, %s244
      %s259 = sphi 0, %s245
      %s263 = sphi 0, %s263
      %s265 = sphi 0, %s263
      %s266 = sphi 0, %s265
      %s280 = sphi 0, %s266
      %s286 = sphi 0, %s288
      %s289 = sphi 0, %s286
      %s290 = sphi 0, %s289
      %s306 = sphi 0, %s290
    $region4: #{tpu_custom_call.1} parent=1 // loop_header_branch
      %33 = sbr.rel (%p31) target = $region8
    $region5: #{tpu_custom_call.1} parent=1 // loop_body
      %s35 = ssub.s32 %s30, 1
      %s36 = ssub.s32 %s30, 2
      %s37 = sadd.s32 %s30, 1
      %s38 = ssub.s32 %s30, %s37
      %p39 = scmp.eq.s32.totalorder %s38, 0
      %s41 = sadd.s32 %s40, 1
      %s42 = scalar_select %p39, %s40, %s41
      %p45 = pneg %p39
      %p46 = scmp.eq.s32.totalorder %s30, 1
      %p47 = por %p45, %p46
      %p48 = scmp.ne.s32.totalorder %s40, %s43
      %p49 = scmp.eq.s32.totalorder %s30, 0
      %p50 = por %p48, %p49
      %p51 = scmp.ne.s32.totalorder %s40, %s43
      %p52 = scmp.eq.s32.totalorder %s35, 1
      %p53 = por %p51, %p52
      %p54 = scmp.ne.s32.totalorder %s43, %s44
      %p55 = scmp.eq.s32.totalorder %s35, 0
      %p56 = por %p54, %p55
      %p57 = scmp.ne.s32.totalorder %s43, %s44
      %p58 = scmp.eq.s32.totalorder %s36, 1
      %p59 = por %p57, %p58
      %p61 = scmp.ne.s32.totalorder %s44, %s60
      %p62 = scmp.eq.s32.totalorder %s36, 0
      %p63 = por %p61, %p62
      %s64 = ssub.s32 %s30, %s37
      %p65 = scmp.eq.s32.totalorder %s64, 0
      %s67 = sadd.s32 %s66, 1
      %s68 = scalar_select %p65, %s66, %s67
      %p71 = pneg %p65
      %p72 = scmp.eq.s32.totalorder %s30, 1
      %p73 = por %p71, %p72
      %p74 = scmp.ne.s32.totalorder %s66, %s69
      %p75 = scmp.eq.s32.totalorder %s30, 0
      %p76 = por %p74, %p75
      %p77 = scmp.ne.s32.totalorder %s66, %s69
      %p78 = scmp.eq.s32.totalorder %s35, 1
      %p79 = por %p77, %p78
      %p80 = scmp.ne.s32.totalorder %s69, %s70
      %p81 = scmp.eq.s32.totalorder %s35, 0
      %p82 = por %p80, %p81
      %p83 = scmp.ne.s32.totalorder %s69, %s70
      %p84 = scmp.eq.s32.totalorder %s36, 1
      %p85 = por %p83, %p84
      %p87 = scmp.ne.s32.totalorder %s70, %s86
      %p88 = scmp.eq.s32.totalorder %s36, 0
      %p89 = por %p87, %p88
      %s90 = ssub.s32 %s30, %s37
      %p91 = scmp.eq.s32.totalorder %s90, 0
      %s93 = sadd.s32 %s92, 1
      %s94 = scalar_select %p91, %s92, %s93
      %p97 = pneg %p91
      %p98 = scmp.eq.s32.totalorder %s30, 1
      %p99 = por %p97, %p98
      %p100 = scmp.ne.s32.totalorder %s92, %s95
      %p101 = scmp.eq.s32.totalorder %s30, 0
      %p102 = por %p100, %p101
      %p103 = scmp.ne.s32.totalorder %s92, %s95
      %p104 = scmp.eq.s32.totalorder %s35, 1
      %p105 = por %p103, %p104
      %p106 = scmp.ne.s32.totalorder %s95, %s96
      %p107 = scmp.eq.s32.totalorder %s35, 0
      %p108 = por %p106, %p107
      %p109 = scmp.ne.s32.totalorder %s95, %s96
      %p110 = scmp.eq.s32.totalorder %s36, 1
      %p111 = por %p109, %p110
      %p113 = scmp.ne.s32.totalorder %s96, %s112
      %p114 = scmp.eq.s32.totalorder %s36, 0
      %p115 = por %p113, %p114
      %s117 = sadd.s32 %s116, 1
      %p120 = scmp.eq.s32.totalorder %s30, 1
      %p121 = scmp.ne.s32.totalorder %s116, %s118
      %p122 = scmp.eq.s32.totalorder %s30, 0
      %p123 = por %p121, %p122
      %p124 = scmp.ne.s32.totalorder %s116, %s118
      %p125 = scmp.eq.s32.totalorder %s35, 1
      %p126 = por %p124, %p125
      %p127 = scmp.ne.s32.totalorder %s118, %s119
      %p128 = scmp.eq.s32.totalorder %s35, 0
      %p129 = por %p127, %p128
      %p130 = scmp.ne.s32.totalorder %s118, %s119
      %p131 = scmp.eq.s32.totalorder %s36, 1
      %p132 = por %p130, %p131
      %p134 = scmp.ne.s32.totalorder %s119, %s133
      %p135 = scmp.eq.s32.totalorder %s36, 0
      %p136 = por %p134, %p135
      %s138 = sadd.s32 %s137, 1
      %p141 = scmp.eq.s32.totalorder %s30, 1
      %p142 = scmp.ne.s32.totalorder %s137, %s139
      %p143 = scmp.eq.s32.totalorder %s30, 0
      %p144 = por %p142, %p143
      %p145 = scmp.ne.s32.totalorder %s137, %s139
      %p146 = scmp.eq.s32.totalorder %s35, 1
      %p147 = por %p145, %p146
      %p148 = scmp.ne.s32.totalorder %s139, %s140
      %p149 = scmp.eq.s32.totalorder %s35, 0
      %p150 = por %p148, %p149
      %p151 = scmp.ne.s32.totalorder %s139, %s140
      %p152 = scmp.eq.s32.totalorder %s36, 1
      %p153 = por %p151, %p152
      %p155 = scmp.ne.s32.totalorder %s140, %s154
      %p156 = scmp.eq.s32.totalorder %s36, 0
      %p157 = por %p155, %p156
      %s159 = sadd.s32 %s158, 1
      %p162 = scmp.eq.s32.totalorder %s30, 1
      %p163 = scmp.ne.s32.totalorder %s158, %s160
      %p164 = scmp.eq.s32.totalorder %s30, 0
      %p165 = por %p163, %p164
      %p166 = scmp.ne.s32.totalorder %s158, %s160
      %p167 = scmp.eq.s32.totalorder %s35, 1
      %p168 = por %p166, %p167
      %p169 = scmp.ne.s32.totalorder %s160, %s161
      %p170 = scmp.eq.s32.totalorder %s35, 0
      %p171 = por %p169, %p170
      %p172 = scmp.ne.s32.totalorder %s160, %s161
      %p173 = scmp.eq.s32.totalorder %s36, 1
      %p174 = por %p172, %p173
      %p176 = scmp.ne.s32.totalorder %s161, %s175
      %p177 = scmp.eq.s32.totalorder %s36, 0
      %p178 = por %p176, %p177
      %s180 = sadd.s32 %s179, 1
      %p183 = scmp.eq.s32.totalorder %s30, 1
      %p184 = scmp.ne.s32.totalorder %s179, %s181
      %p185 = scmp.eq.s32.totalorder %s30, 0
      %p186 = por %p184, %p185
      %p187 = scmp.ne.s32.totalorder %s179, %s181
      %p188 = scmp.eq.s32.totalorder %s35, 1
      %p189 = por %p187, %p188
      %p190 = scmp.ne.s32.totalorder %s181, %s182
      %p191 = scmp.eq.s32.totalorder %s35, 0
      %p192 = por %p190, %p191
      %p193 = scmp.ne.s32.totalorder %s181, %s182
      %p194 = scmp.eq.s32.totalorder %s36, 1
      %p195 = por %p193, %p194
      %p197 = scmp.ne.s32.totalorder %s182, %s196
      %p198 = scmp.eq.s32.totalorder %s36, 0
      %p199 = por %p197, %p198
      %s201 = sadd.s32 %s200, 1
      %p204 = scmp.eq.s32.totalorder %s30, 1
      %p205 = scmp.ne.s32.totalorder %s200, %s202
      %p206 = scmp.eq.s32.totalorder %s30, 0
      %p207 = por %p205, %p206
      %p208 = scmp.ne.s32.totalorder %s200, %s202
      %p209 = scmp.eq.s32.totalorder %s35, 1
      %p210 = por %p208, %p209
      %p211 = scmp.ne.s32.totalorder %s202, %s203
      %p212 = scmp.eq.s32.totalorder %s35, 0
      %p213 = por %p211, %p212
      %p214 = scmp.ne.s32.totalorder %s202, %s203
      %p215 = scmp.eq.s32.totalorder %s36, 1
      %p216 = por %p214, %p215
      %p218 = scmp.ne.s32.totalorder %s203, %s217
      %p219 = scmp.eq.s32.totalorder %s36, 0
      %p220 = por %p218, %p219
      %s222 = sadd.s32 %s221, 1
      %p225 = scmp.eq.s32.totalorder %s30, 1
      %p226 = scmp.ne.s32.totalorder %s221, %s223
      %p227 = scmp.eq.s32.totalorder %s30, 0
      %p228 = por %p226, %p227
      %p229 = scmp.ne.s32.totalorder %s221, %s223
      %p230 = scmp.eq.s32.totalorder %s35, 1
      %p231 = por %p229, %p230
      %p232 = scmp.ne.s32.totalorder %s223, %s224
      %p233 = scmp.eq.s32.totalorder %s35, 0
      %p234 = por %p232, %p233
      %p235 = scmp.ne.s32.totalorder %s223, %s224
      %p236 = scmp.eq.s32.totalorder %s36, 1
      %p237 = por %p235, %p236
      %p239 = scmp.ne.s32.totalorder %s224, %s238
      %p240 = scmp.eq.s32.totalorder %s36, 0
      %p241 = por %p239, %p240
      %s243 = sadd.s32 %s242, 1
      %p246 = scmp.eq.s32.totalorder %s30, 1
      %p247 = scmp.ne.s32.totalorder %s242, %s244
      %p248 = scmp.eq.s32.totalorder %s30, 0
      %p249 = por %p247, %p248
      %p250 = scmp.ne.s32.totalorder %s242, %s244
      %p251 = scmp.eq.s32.totalorder %s35, 1
      %p252 = por %p250, %p251
      %p253 = scmp.ne.s32.totalorder %s244, %s245
      %p254 = scmp.eq.s32.totalorder %s35, 0
      %p255 = por %p253, %p254
      %p256 = scmp.ne.s32.totalorder %s244, %s245
      %p257 = scmp.eq.s32.totalorder %s36, 1
      %p258 = por %p256, %p257
      %p260 = scmp.ne.s32.totalorder %s245, %s259
      %p261 = scmp.eq.s32.totalorder %s36, 0
      %p262 = por %p260, %p261
      %s264 = sadd.s32 %s263, 1
      %p267 = scmp.eq.s32.totalorder %s30, 1
      %p268 = scmp.ne.s32.totalorder %s263, %s265
      %p269 = scmp.eq.s32.totalorder %s30, 0
      %p270 = por %p268, %p269
      %p271 = scmp.ne.s32.totalorder %s263, %s265
      %p272 = scmp.eq.s32.totalorder %s35, 1
      %p273 = por %p271, %p272
      %p274 = scmp.ne.s32.totalorder %s265, %s266
      %p275 = scmp.eq.s32.totalorder %s35, 0
      %p276 = por %p274, %p275
      %p277 = scmp.ne.s32.totalorder %s265, %s266
      %p278 = scmp.eq.s32.totalorder %s36, 1
      %p279 = por %p277, %p278
      %p281 = scmp.ne.s32.totalorder %s266, %s280
      %p282 = scmp.eq.s32.totalorder %s36, 0
      %p283 = por %p281, %p282
      %s284 = ssub.s32 %s30, %s37
      %p285 = scmp.eq.s32.totalorder %s284, 0
      %s287 = sadd.s32 %s286, 1
      %s288 = scalar_select %p285, %s286, %s287
      %p291 = pneg %p285
      %p292 = scmp.eq.s32.totalorder %s30, 1
      %p293 = por %p291, %p292
      %p294 = scmp.ne.s32.totalorder %s286, %s289
      %p295 = scmp.eq.s32.totalorder %s30, 0
      %p296 = por %p294, %p295
      %p297 = scmp.ne.s32.totalorder %s286, %s289
      %p298 = scmp.eq.s32.totalorder %s35, 1
      %p299 = por %p297, %p298
      %p300 = scmp.ne.s32.totalorder %s289, %s290
      %p301 = scmp.eq.s32.totalorder %s35, 0
      %p302 = por %p300, %p301
      %p303 = scmp.ne.s32.totalorder %s289, %s290
      %p304 = scmp.eq.s32.totalorder %s36, 1
      %p305 = por %p303, %p304
      %p307 = scmp.ne.s32.totalorder %s290, %s306
      %p308 = scmp.eq.s32.totalorder %s36, 0
      %p309 = por %p307, %p308
      %p310 = scmp.le.s32.totalorder 1, %s30
      %p311 = scmp.lt.s32.totalorder %s30, 3
      %p312 = pnand %p310, %p311
      %p313 = pneg %p312
      // Predicated region
      $region9: #{tpu_custom_call.1} parent=5 // pred_check
        _
      $region10: #{tpu_custom_call.1} parent=5 // pred_check_branch
        %315 = sbr.rel (%p312) target = $region12
      $region11: #{tpu_custom_call.1} parent=5 // pred_region
        %s316 = ssub.s32 %s30, 1
        // Predicated region
        $region13: #{tpu_custom_call.1} parent=11 // pred_check
          %p317 = pneg %p129
        $region14: #{tpu_custom_call.1} parent=11 // pred_check_branch
          %319 = sbr.rel (%p317) target = $region16
        $region15: #{tpu_custom_call.1} parent=11 // pred_region
          %321 = vsyncadd [#allocation9], 0
          %s322 = sshll.u32 %s3, 4
          %s323 = int_to_ptr.hbm [resolvable:$true] %s322
          %s324 = sshll.u32 [#allocation8], 4
          %s325 = int_to_ptr.vmem [resolvable:$true] %s324
          %330 = dma.hbm_to_vmem [thread:$0]  %s323, 192, %s325, [#allocation9], 64, 64, 4
        $region16: #{tpu_custom_call.1} parent=11 // pred_fallthru
          _
        // Predicated region
        $region17: #{tpu_custom_call.1} parent=11 // pred_check
          %p331 = pneg %p150
        $region18: #{tpu_custom_call.1} parent=11 // pred_check_branch
          %333 = sbr.rel (%p331) target = $region20
        $region19: #{tpu_custom_call.1} parent=11 // pred_region
          %335 = vsyncadd [#allocation9], 0
          %s336 = sshll.u32 %s4, 4
          %s337 = int_to_ptr.hbm [resolvable:$true] %s336
          %s338 = sshll.u32 [#allocation10], 4
          %s339 = int_to_ptr.vmem [resolvable:$true] %s338
          %344 = dma.hbm_to_vmem [thread:$0]  %s337, 1024, %s339, [#allocation9], 64, 64, 4
        $region20: #{tpu_custom_call.1} parent=11 // pred_fallthru
          _
        // Predicated region
        $region21: #{tpu_custom_call.1} parent=11 // pred_check
          %p345 = pneg %p171
        $region22: #{tpu_custom_call.1} parent=11 // pred_check_branch
          %347 = sbr.rel (%p345) target = $region24
        $region23: #{tpu_custom_call.1} parent=11 // pred_region
          %349 = vsyncadd [#allocation12], 0
          %s350 = sshll.u32 %s5, 4
          %s351 = int_to_ptr.hbm [resolvable:$true] %s350
          %s352 = sshll.u32 [#allocation11], 4
          %s353 = int_to_ptr.vmem [resolvable:$true] %s352
          %358 = dma.hbm_to_vmem [thread:$0]  %s351, 1024, %s353, [#allocation12], 64, 64, 4
        $region24: #{tpu_custom_call.1} parent=11 // pred_fallthru
          _
        // Predicated region
        $region25: #{tpu_custom_call.1} parent=11 // pred_check
          %p359 = pneg %p192
        $region26: #{tpu_custom_call.1} parent=11 // pred_check_branch
          %361 = sbr.rel (%p359) target = $region28
        $region27: #{tpu_custom_call.1} parent=11 // pred_region
          %363 = vsyncadd [#allocation12], 0
          %s364 = sshll.u32 %s6, 4
          %s365 = int_to_ptr.hbm [resolvable:$true] %s364
          %s366 = sshll.u32 [#allocation13], 4
          %s367 = int_to_ptr.vmem [resolvable:$true] %s366
          %372 = dma.hbm_to_vmem [thread:$0]  %s365, 128, %s367, [#allocation12], 64, 64, 4
        $region28: #{tpu_custom_call.1} parent=11 // pred_fallthru
          _
        // Predicated region
        $region29: #{tpu_custom_call.1} parent=11 // pred_check
          %p373 = pneg %p213
        $region30: #{tpu_custom_call.1} parent=11 // pred_check_branch
          %375 = sbr.rel (%p373) target = $region32
        $region31: #{tpu_custom_call.1} parent=11 // pred_region
          %377 = vsyncadd [#allocation15], 0
          %s378 = sshll.u32 %s7, 4
          %s379 = int_to_ptr.hbm [resolvable:$true] %s378
          %s380 = sshll.u32 [#allocation14], 4
          %s381 = int_to_ptr.vmem [resolvable:$true] %s380
          %386 = dma.hbm_to_vmem [thread:$0]  %s379, 1024, %s381, [#allocation15], 64, 64, 4
        $region32: #{tpu_custom_call.1} parent=11 // pred_fallthru
          _
        // Predicated region
        $region33: #{tpu_custom_call.1} parent=11 // pred_check
          %p387 = pneg %p234
        $region34: #{tpu_custom_call.1} parent=11 // pred_check_branch
          %389 = sbr.rel (%p387) target = $region36
        $region35: #{tpu_custom_call.1} parent=11 // pred_region
          %391 = vsyncadd [#allocation15], 0
          %s392 = sshll.u32 %s8, 4
          %s393 = int_to_ptr.hbm [resolvable:$true] %s392
          %s394 = sshll.u32 [#allocation16], 4
          %s395 = int_to_ptr.vmem [resolvable:$true] %s394
          %400 = dma.hbm_to_vmem [thread:$0]  %s393, 1024, %s395, [#allocation15], 64, 64, 4
        $region36: #{tpu_custom_call.1} parent=11 // pred_fallthru
          _
        // Predicated region
        $region37: #{tpu_custom_call.1} parent=11 // pred_check
          %p401 = pneg %p255
        $region38: #{tpu_custom_call.1} parent=11 // pred_check_branch
          %403 = sbr.rel (%p401) target = $region40
        $region39: #{tpu_custom_call.1} parent=11 // pred_region
          %405 = vsyncadd [#allocation18], 0
          %s406 = sshll.u32 %s9, 4
          %s407 = int_to_ptr.hbm [resolvable:$true] %s406
          %s408 = sshll.u32 [#allocation17], 4
          %s409 = int_to_ptr.vmem [resolvable:$true] %s408
          %414 = dma.hbm_to_vmem [thread:$0]  %s407, 1024, %s409, [#allocation18], 64, 64, 4
        $region40: #{tpu_custom_call.1} parent=11 // pred_fallthru
          _
        // Predicated region
        $region41: #{tpu_custom_call.1} parent=11 // pred_check
          %p415 = pneg %p276
        $region42: #{tpu_custom_call.1} parent=11 // pred_check_branch
          %417 = sbr.rel (%p415) target = $region44
        $region43: #{tpu_custom_call.1} parent=11 // pred_region
          _
        $region44: #{tpu_custom_call.1} parent=11 // pred_fallthru
          _
      $region12: #{tpu_custom_call.1} parent=5 // pred_fallthru
        _
      %p418 = scmp.lt.s32.totalorder %s30, 2
      // Predicated region
      $region45: #{tpu_custom_call.1} parent=5 // pred_check
        %p419 = pneg %p418
      $region46: #{tpu_custom_call.1} parent=5 // pred_check_branch
        %421 = sbr.rel (%p419) target = $region48
      $region47: #{tpu_custom_call.1} parent=5 // pred_region
        // Predicated region
        $region49: #{tpu_custom_call.1} parent=47 // pred_check
          %p422 = pneg %p50
        $region50: #{tpu_custom_call.1} parent=47 // pred_check_branch
          %424 = sbr.rel (%p422) target = $region52
        $region51: #{tpu_custom_call.1} parent=47 // pred_region
          %s425 = sand.u32 %s40, 1
          %s426 = scalar_lea.sflag [#allocation3], %s425
          %s427 = sand.u32 %s40, 1
          %s428 = smul.addr %s427, 4
          %s429 = scalar_lea.vmem [#allocation2], %s428
          %431 = vsyncadd %s426, 0
          %s432 = smul.addr %s30, 4
          %s433 = scalar_lea.hbm %s0, %s432
          %s435 = sshll.u32 %s433, 4
          %s436 = int_to_ptr.hbm [resolvable:$true] %s435
          %s437 = sshll.u32 %s429, 4
          %s438 = int_to_ptr.vmem [resolvable:$true] %s437
          %440 = dma.hbm_to_vmem [thread:$0]  %s436, 64, %s438, %s426
        $region52: #{tpu_custom_call.1} parent=47 // pred_fallthru
          _
        // Predicated region
        $region53: #{tpu_custom_call.1} parent=47 // pred_check
          %p441 = pneg %p76
        $region54: #{tpu_custom_call.1} parent=47 // pred_check_branch
          %443 = sbr.rel (%p441) target = $region56
        $region55: #{tpu_custom_call.1} parent=47 // pred_region
          %s444 = sand.u32 %s30, 1
          %s445 = scalar_lea.sflag [#allocation6], %s444
          %s446 = sand.u32 %s66, 1
          %s447 = smul.addr %s446, 4
          %s448 = scalar_lea.vmem [#allocation5], %s447
          %450 = vsyncadd %s445, 0
          %s451 = smul.addr %s30, 4
          %s452 = scalar_lea.hbm %s1, %s451
          %s454 = sshll.u32 %s452, 4
          %s455 = int_to_ptr.hbm [resolvable:$true] %s454
          %s456 = sshll.u32 %s448, 4
          %s457 = int_to_ptr.vmem [resolvable:$true] %s456
          %459 = dma.hbm_to_vmem [thread:$0]  %s455, 64, %s457, %s445
        $region56: #{tpu_custom_call.1} parent=47 // pred_fallthru
          _
        // Predicated region
        $region57: #{tpu_custom_call.1} parent=47 // pred_check
          %p460 = pneg %p102
        $region58: #{tpu_custom_call.1} parent=47 // pred_check_branch
          %462 = sbr.rel (%p460) target = $region60
        $region59: #{tpu_custom_call.1} parent=47 // pred_region
          %s463 = sand.u32 %s30, 1
          %s464 = scalar_lea.sflag [#allocation6], %s463
          %s465 = sand.u32 %s92, 1
          %s466 = smul.addr %s465, 8
          %s467 = scalar_lea.vmem [#allocation7], %s466
          %469 = vsyncadd %s464, 0
          %s470 = smul.addr %s30, 8
          %s471 = scalar_lea.hbm %s2, %s470
          %s473 = sshll.u32 %s471, 4
          %s474 = int_to_ptr.hbm [resolvable:$true] %s473
          %s475 = sshll.u32 %s467, 4
          %s476 = int_to_ptr.vmem [resolvable:$true] %s475
          %478 = dma.hbm_to_vmem [thread:$0]  %s474, 128, %s476, %s464
        $region60: #{tpu_custom_call.1} parent=47 // pred_fallthru
          _
      $region48: #{tpu_custom_call.1} parent=5 // pred_fallthru
        _
      %p479 = scmp.le.s32.totalorder 1, %s30
      %p480 = scmp.lt.s32.totalorder %s30, 3
      %p481 = pnand %p479, %p480
      %p482 = pneg %p481
      // Predicated region
      $region61: #{tpu_custom_call.1} parent=5 // pred_check
        _
      $region62: #{tpu_custom_call.1} parent=5 // pred_check_branch
        %484 = sbr.rel (%p481) target = $region64
      $region63: #{tpu_custom_call.1} parent=5 // pred_region
        %s485 = ssub.s32 %s30, 1
        %s486 = sand.u32 %s43, 1
        %s487 = scalar_lea.sflag [#allocation3], %s486
        %s488 = sand.u32 %s43, 1
        %s489 = smul.addr %s488, 4
        %s490 = scalar_lea.vmem [#allocation2], %s489
        // Predicated region
        $region65: #{tpu_custom_call.1} parent=63 // pred_check
          %p491 = pneg %p56
        $region66: #{tpu_custom_call.1} parent=63 // pred_check_branch
          %493 = sbr.rel (%p491) target = $region68
        $region67: #{tpu_custom_call.1} parent=63 // pred_region
          %495 = dma.done %s487, 64
        $region68: #{tpu_custom_call.1} parent=63 // pred_fallthru
          _
        %s496 = sand.u32 %s35, 1
        %s497 = scalar_lea.sflag [#allocation6], %s496
        %s498 = sand.u32 %s69, 1
        %s499 = smul.addr %s498, 4
        %s500 = scalar_lea.vmem [#allocation5], %s499
        // Predicated region
        $region69: #{tpu_custom_call.1} parent=63 // pred_check
          %p501 = pneg %p82
        $region70: #{tpu_custom_call.1} parent=63 // pred_check_branch
          %503 = sbr.rel (%p501) target = $region72
        $region71: #{tpu_custom_call.1} parent=63 // pred_region
          %505 = dma.done %s497, 64
        $region72: #{tpu_custom_call.1} parent=63 // pred_fallthru
          _
        %s506 = sand.u32 %s35, 1
        %s507 = scalar_lea.sflag [#allocation6], %s506
        %s508 = sand.u32 %s95, 1
        %s509 = smul.addr %s508, 8
        %s510 = scalar_lea.vmem [#allocation7], %s509
        // Predicated region
        $region73: #{tpu_custom_call.1} parent=63 // pred_check
          %p511 = pneg %p108
        $region74: #{tpu_custom_call.1} parent=63 // pred_check_branch
          %513 = sbr.rel (%p511) target = $region76
        $region75: #{tpu_custom_call.1} parent=63 // pred_region
          %515 = dma.done %s507, 128
        $region76: #{tpu_custom_call.1} parent=63 // pred_fallthru
          _
        // Predicated region
        $region77: #{tpu_custom_call.1} parent=63 // pred_check
          %p516 = pneg %p129
        $region78: #{tpu_custom_call.1} parent=63 // pred_check_branch
          %518 = sbr.rel (%p516) target = $region80
        $region79: #{tpu_custom_call.1} parent=63 // pred_region
          %520 = dma.done [#allocation9], 192
        $region80: #{tpu_custom_call.1} parent=63 // pred_fallthru
          _
        // Predicated region
        $region81: #{tpu_custom_call.1} parent=63 // pred_check
          %p521 = pneg %p150
        $region82: #{tpu_custom_call.1} parent=63 // pred_check_branch
          %523 = sbr.rel (%p521) target = $region84
        $region83: #{tpu_custom_call.1} parent=63 // pred_region
          %525 = dma.done [#allocation9], 1024
        $region84: #{tpu_custom_call.1} parent=63 // pred_fallthru
          _
        // Predicated region
        $region85: #{tpu_custom_call.1} parent=63 // pred_check
          %p526 = pneg %p171
        $region86: #{tpu_custom_call.1} parent=63 // pred_check_branch
          %528 = sbr.rel (%p526) target = $region88
        $region87: #{tpu_custom_call.1} parent=63 // pred_region
          %530 = dma.done [#allocation12], 1024
        $region88: #{tpu_custom_call.1} parent=63 // pred_fallthru
          _
        // Predicated region
        $region89: #{tpu_custom_call.1} parent=63 // pred_check
          %p531 = pneg %p192
        $region90: #{tpu_custom_call.1} parent=63 // pred_check_branch
          %533 = sbr.rel (%p531) target = $region92
        $region91: #{tpu_custom_call.1} parent=63 // pred_region
          %535 = dma.done [#allocation12], 128
        $region92: #{tpu_custom_call.1} parent=63 // pred_fallthru
          _
        // Predicated region
        $region93: #{tpu_custom_call.1} parent=63 // pred_check
          %p536 = pneg %p213
        $region94: #{tpu_custom_call.1} parent=63 // pred_check_branch
          %538 = sbr.rel (%p536) target = $region96
        $region95: #{tpu_custom_call.1} parent=63 // pred_region
          %540 = dma.done [#allocation15], 1024
        $region96: #{tpu_custom_call.1} parent=63 // pred_fallthru
          _
        // Predicated region
        $region97: #{tpu_custom_call.1} parent=63 // pred_check
          %p541 = pneg %p234
        $region98: #{tpu_custom_call.1} parent=63 // pred_check_branch
          %543 = sbr.rel (%p541) target = $region100
        $region99: #{tpu_custom_call.1} parent=63 // pred_region
          %545 = dma.done [#allocation15], 1024
        $region100: #{tpu_custom_call.1} parent=63 // pred_fallthru
          _
        // Predicated region
        $region101: #{tpu_custom_call.1} parent=63 // pred_check
          %p546 = pneg %p255
        $region102: #{tpu_custom_call.1} parent=63 // pred_check_branch
          %548 = sbr.rel (%p546) target = $region104
        $region103: #{tpu_custom_call.1} parent=63 // pred_region
          %550 = dma.done [#allocation18], 1024
        $region104: #{tpu_custom_call.1} parent=63 // pred_fallthru
          _
        %s551 = sand.u32 %s43, 1
        %s552 = scalar_lea.sflag [#allocation3], %s551
        %s553 = sand.u32 %s43, 1
        %s554 = smul.addr %s553, 4
        %s555 = scalar_lea.vmem [#allocation2], %s554
        %p556 = pneg %p56
        %p557 = pneg %p53
        %s558 = sand.u32 %s35, 1
        %s559 = scalar_lea.sflag [#allocation6], %s558
        %s560 = sand.u32 %s69, 1
        %s561 = smul.addr %s560, 4
        %s562 = scalar_lea.vmem [#allocation5], %s561
        %p563 = pneg %p82
        %p564 = pneg %p79
        %s565 = sand.u32 %s35, 1
        %s566 = scalar_lea.sflag [#allocation6], %s565
        %s567 = sand.u32 %s95, 1
        %s568 = smul.addr %s567, 8
        %s569 = scalar_lea.vmem [#allocation7], %s568
        %p570 = pneg %p108
        %p571 = pneg %p105
        %p572 = pneg %p129
        %p573 = pneg %p126
        %p574 = pneg %p150
        %p575 = pneg %p147
        %p576 = pneg %p171
        %p577 = pneg %p168
        %p578 = pneg %p192
        %p579 = pneg %p189
        %p580 = pneg %p213
        %p581 = pneg %p210
        %p582 = pneg %p234
        %p583 = pneg %p231
        %p584 = pneg %p255
        %p585 = pneg %p252
        %p586 = pneg %p276
        %p587 = pneg %p273
        %p588 = pneg %p302
        %p589 = pneg %p299
        %s590 = sand.u32 %s289, 1
        %s591 = scalar_lea.sflag [#allocation4], %s590
        %s592 = sand.u32 %s289, 1
        %s593 = smul.addr %s592, 16
        %s594 = scalar_lea.vmem [#allocation19], %s593
        %v596 = vld [vmem:[%s490] sm:$0xf]
        %v597 = vld [vmem:[%s500] sm:$0xf]
        %v598 = vld [vmem:[%s510] sm:$0xff]
        %v599 = vld [vmem:[%s10] sm:$0x1]
        %v600 = vld [vmem:[%s10 + $0x1] sm:$0x1]
        %v601 = vld [vmem:[%s10 + $0x2] sm:$0x1]
        %v602 = vld [vmem:[%s10 + $0x3] sm:$0x1]
        %v603 = vld [vmem:[%s10 + $0x4] sm:$0x1]
        %v604 = vld [vmem:[%s10 + $0x5] sm:$0x1]
        %v605 = vld [vmem:[#allocation8] sm:$0xf]
        %v606 = vld [vmem:[#allocation8 + $0x4] sm:$0xf]
        %v607 = vld [vmem:[#allocation8 + $0x8] sm:$0xf]
        %v608 = vperm.slane %v599, 0
        %v612 = vunpack.c.l.b16 %v605
        %v613 = vunpack.c.l.b16 %v606
        %v614 = vunpack.c.l.b16 %v607
        %v615 = vpack.c.b16 %v613, %v612
        %v616 = vpack.c.b16 %v614, %v614
        %vm618 = vcmask 195584
        %v620 = vsel %vm618, %v596, 0
        %vm622 = vcmask 1043456
        %v624 = vsel %vm622, %v616, 0
        %626 = vmatpush.bf16.msra.mxu0 0
        %627 = vmatpush.bf16.msra.mxu0 0
        %628 = vmatpush.bf16.msra.mxu0 0
        %629 = vmatpush.bf16.msra.mxu0 0
        %630 = vmatpush.bf16.msra.mxu0 0
        %631 = vmatpush.bf16.msra.mxu0 0
        %632 = vmatpush.bf16.msra.mxu0 %v624
        %633 = vmatpush.bf16.msra.mxu0 %v615
        %634 = vmatmul.bf16.gmra.mxu0 %v620
        %v635 = vpop.f32.mrf.mxu0
        %v636 = vadd.f32 %v608, %v635
        %v637 = vpop.f32.mrf.mxu0
        %638 = vdwg.mxu0
        %v639 = vmax.f32 %v636, 0.0
        %v640 = vpack.c.bf16 %v639, %v639
        %v641 = vld [vmem:[#allocation10] sm:$0xf]
        %v642 = vld [vmem:[#allocation10 + $0x4] sm:$0xf]
        %v643 = vld [vmem:[#allocation10 + $0x8] sm:$0xf]
        %v644 = vld [vmem:[#allocation10 + $0xc] sm:$0xf]
        %v645 = vld [vmem:[#allocation10 + $0x10] sm:$0xf]
        %v646 = vld [vmem:[#allocation10 + $0x14] sm:$0xf]
        %v647 = vld [vmem:[#allocation10 + $0x18] sm:$0xf]
        %v648 = vld [vmem:[#allocation10 + $0x1c] sm:$0xf]
        %v649 = vld [vmem:[#allocation10 + $0x20] sm:$0xf]
        %v650 = vld [vmem:[#allocation10 + $0x24] sm:$0xf]
        %v651 = vld [vmem:[#allocation10 + $0x28] sm:$0xf]
        %v652 = vld [vmem:[#allocation10 + $0x2c] sm:$0xf]
        %v653 = vld [vmem:[#allocation10 + $0x30] sm:$0xf]
        %v654 = vld [vmem:[#allocation10 + $0x34] sm:$0xf]
        %v655 = vld [vmem:[#allocation10 + $0x38] sm:$0xf]
        %v656 = vld [vmem:[#allocation10 + $0x3c] sm:$0xf]
        %v657 = vperm.slane %v600, 0
        %v674 = vunpack.c.l.b16 %v641
        %v675 = vunpack.c.l.b16 %v642
        %v676 = vunpack.c.l.b16 %v643
        %v677 = vunpack.c.l.b16 %v644
        %v678 = vunpack.c.l.b16 %v645
        %v679 = vunpack.c.l.b16 %v646
        %v680 = vunpack.c.l.b16 %v647
        %v681 = vunpack.c.l.b16 %v648
        %v682 = vunpack.c.l.b16 %v649
        %v683 = vunpack.c.l.b16 %v650
        %v684 = vunpack.c.l.b16 %v651
        %v685 = vunpack.c.l.b16 %v652
        %v686 = vunpack.c.l.b16 %v653
        %v687 = vunpack.c.l.b16 %v654
        %v688 = vunpack.c.l.b16 %v655
        %v689 = vunpack.c.l.b16 %v656
        %v690 = vpack.c.b16 %v675, %v674
        %v691 = vpack.c.b16 %v677, %v676
        %v692 = vpack.c.b16 %v679, %v678
        %v693 = vpack.c.b16 %v681, %v680
        %v694 = vpack.c.b16 %v683, %v682
        %v695 = vpack.c.b16 %v685, %v684
        %v696 = vpack.c.b16 %v687, %v686
        %v697 = vpack.c.b16 %v689, %v688
        %706 = vmatpush.bf16.msra.mxu0 %v697
        %707 = vmatpush.bf16.msra.mxu0 %v696
        %708 = vmatpush.bf16.msra.mxu0 %v695
        %709 = vmatpush.bf16.msra.mxu0 %v694
        %710 = vmatpush.bf16.msra.mxu0 %v693
        %711 = vmatpush.bf16.msra.mxu0 %v692
        %712 = vmatpush.bf16.msra.mxu0 %v691
        %713 = vmatpush.bf16.msra.mxu0 %v690
        %714 = vmatmul.bf16.gmra.mxu0 %v640
        %v715 = vpop.f32.mrf.mxu0
        %v716 = vadd.f32 %v657, %v715
        %v717 = vpop.f32.mrf.mxu0
        %718 = vdwg.mxu0
        %v719 = vmax.f32 %v716, 0.0
        %v720 = vpack.c.bf16 %v719, %v719
        %v721 = vld [vmem:[#allocation11] sm:$0xf]
        %v722 = vld [vmem:[#allocation11 + $0x4] sm:$0xf]
        %v723 = vld [vmem:[#allocation11 + $0x8] sm:$0xf]
        %v724 = vld [vmem:[#allocation11 + $0xc] sm:$0xf]
        %v725 = vld [vmem:[#allocation11 + $0x10] sm:$0xf]
        %v726 = vld [vmem:[#allocation11 + $0x14] sm:$0xf]
        %v727 = vld [vmem:[#allocation11 + $0x18] sm:$0xf]
        %v728 = vld [vmem:[#allocation11 + $0x1c] sm:$0xf]
        %v729 = vld [vmem:[#allocation11 + $0x20] sm:$0xf]
        %v730 = vld [vmem:[#allocation11 + $0x24] sm:$0xf]
        %v731 = vld [vmem:[#allocation11 + $0x28] sm:$0xf]
        %v732 = vld [vmem:[#allocation11 + $0x2c] sm:$0xf]
        %v733 = vld [vmem:[#allocation11 + $0x30] sm:$0xf]
        %v734 = vld [vmem:[#allocation11 + $0x34] sm:$0xf]
        %v735 = vld [vmem:[#allocation11 + $0x38] sm:$0xf]
        %v736 = vld [vmem:[#allocation11 + $0x3c] sm:$0xf]
        %v737 = vperm.slane %v601, 0
        %v754 = vunpack.c.l.b16 %v721
        %v755 = vunpack.c.l.b16 %v722
        %v756 = vunpack.c.l.b16 %v723
        %v757 = vunpack.c.l.b16 %v724
        %v758 = vunpack.c.l.b16 %v725
        %v759 = vunpack.c.l.b16 %v726
        %v760 = vunpack.c.l.b16 %v727
        %v761 = vunpack.c.l.b16 %v728
        %v762 = vunpack.c.l.b16 %v729
        %v763 = vunpack.c.l.b16 %v730
        %v764 = vunpack.c.l.b16 %v731
        %v765 = vunpack.c.l.b16 %v732
        %v766 = vunpack.c.l.b16 %v733
        %v767 = vunpack.c.l.b16 %v734
        %v768 = vunpack.c.l.b16 %v735
        %v769 = vunpack.c.l.b16 %v736
        %v770 = vpack.c.b16 %v755, %v754
        %v771 = vpack.c.b16 %v757, %v756
        %v772 = vpack.c.b16 %v759, %v758
        %v773 = vpack.c.b16 %v761, %v760
        %v774 = vpack.c.b16 %v763, %v762
        %v775 = vpack.c.b16 %v765, %v764
        %v776 = vpack.c.b16 %v767, %v766
        %v777 = vpack.c.b16 %v769, %v768
        %786 = vmatpush.bf16.msra.mxu0 %v777
        %787 = vmatpush.bf16.msra.mxu0 %v776
        %788 = vmatpush.bf16.msra.mxu0 %v775
        %789 = vmatpush.bf16.msra.mxu0 %v774
        %790 = vmatpush.bf16.msra.mxu0 %v773
        %791 = vmatpush.bf16.msra.mxu0 %v772
        %792 = vmatpush.bf16.msra.mxu0 %v771
        %793 = vmatpush.bf16.msra.mxu0 %v770
        %794 = vmatmul.bf16.gmra.mxu0 %v720
        %v795 = vpop.f32.mrf.mxu0
        %v796 = vadd.f32 %v737, %v795
        %v797 = vpop.f32.mrf.mxu0
        %798 = vdwg.mxu0
        %v799 = vlaneseq
        %v800 = vand.u32 %v799, 127
        %v801 = vmax.f32 %v796, -4.0
        %v802 = vmin.f32 %v801, 15.0
        %v803 = vmul.f32 %v802, 1.442695
        %v804 = vpow.pop %v803
        %vm805 = vcmp.lt.s32.totalorder %v800, 16
        %vm806 = vcmp.lt.s32.totalorder %v800, 32
        %v807 = vsel %vm806, %v804, 0.0
        %v808 = vsel %vm805, %v796, %v807
        %v809 = vmul.f32 %v808, %v598
        %v810 = vpack.c.bf16 %v809, %v809
        %v811 = vld [vmem:[#allocation13] sm:$0xf]
        %v812 = vld [vmem:[#allocation13 + $0x4] sm:$0xf]
        %v813 = vld [vmem:[#allocation14] sm:$0xf]
        %v814 = vld [vmem:[#allocation14 + $0x4] sm:$0xf]
        %v815 = vld [vmem:[#allocation14 + $0x8] sm:$0xf]
        %v816 = vld [vmem:[#allocation14 + $0xc] sm:$0xf]
        %v817 = vld [vmem:[#allocation14 + $0x10] sm:$0xf]
        %v818 = vld [vmem:[#allocation14 + $0x14] sm:$0xf]
        %v819 = vld [vmem:[#allocation14 + $0x18] sm:$0xf]
        %v820 = vld [vmem:[#allocation14 + $0x1c] sm:$0xf]
        %v821 = vld [vmem:[#allocation14 + $0x20] sm:$0xf]
        %v822 = vld [vmem:[#allocation14 + $0x24] sm:$0xf]
        %v823 = vld [vmem:[#allocation14 + $0x28] sm:$0xf]
        %v824 = vld [vmem:[#allocation14 + $0x2c] sm:$0xf]
        %v825 = vld [vmem:[#allocation14 + $0x30] sm:$0xf]
        %v826 = vld [vmem:[#allocation14 + $0x34] sm:$0xf]
        %v827 = vld [vmem:[#allocation14 + $0x38] sm:$0xf]
        %v828 = vld [vmem:[#allocation14 + $0x3c] sm:$0xf]
        %v845 = vunpack.c.l.b16 %v813
        %v846 = vunpack.c.l.b16 %v814
        %v847 = vunpack.c.l.b16 %v815
        %v848 = vunpack.c.l.b16 %v816
        %v849 = vunpack.c.l.b16 %v817
        %v850 = vunpack.c.l.b16 %v818
        %v851 = vunpack.c.l.b16 %v819
        %v852 = vunpack.c.l.b16 %v820
        %v853 = vunpack.c.l.b16 %v821
        %v854 = vunpack.c.l.b16 %v822
        %v855 = vunpack.c.l.b16 %v823
        %v856 = vunpack.c.l.b16 %v824
        %v857 = vunpack.c.l.b16 %v825
        %v858 = vunpack.c.l.b16 %v826
        %v859 = vunpack.c.l.b16 %v827
        %v860 = vunpack.c.l.b16 %v828
        %v861 = vpack.c.b16 %v846, %v845
        %v862 = vpack.c.b16 %v848, %v847
        %v863 = vpack.c.b16 %v850, %v849
        %v864 = vpack.c.b16 %v852, %v851
        %v865 = vpack.c.b16 %v854, %v853
        %v866 = vpack.c.b16 %v856, %v855
        %v867 = vpack.c.b16 %v858, %v857
        %v868 = vpack.c.b16 %v860, %v859
        %877 = vmatpush.bf16.msra.mxu0 %v868
        %878 = vmatpush.bf16.msra.mxu0 %v867
        %879 = vmatpush.bf16.msra.mxu0 %v866
        %880 = vmatpush.bf16.msra.mxu0 %v865
        %881 = vmatpush.bf16.msra.mxu0 %v864
        %882 = vmatpush.bf16.msra.mxu0 %v863
        %883 = vmatpush.bf16.msra.mxu0 %v862
        %884 = vmatpush.bf16.msra.mxu0 %v861
        %885 = vmatmul.bf16.gmra.mxu0 %v810
        %v886 = vpop.f32.mrf.mxu0
        %v887 = vadd.f32 0.0, %v886
        %v888 = vpop.f32.mrf.mxu0
        %889 = vdwg.mxu0
        %v892 = vunpack.c.l.b16 %v811
        %v893 = vunpack.c.l.b16 %v812
        %v894 = vpack.c.b16 %v893, %v892
        %vm896 = vcmask 130048
        %v898 = vsel %vm896, %v597, 0
        %900 = vmatpush.bf16.msra.mxu0 0
        %901 = vmatpush.bf16.msra.mxu0 0
        %902 = vmatpush.bf16.msra.mxu0 0
        %903 = vmatpush.bf16.msra.mxu0 0
        %904 = vmatpush.bf16.msra.mxu0 0
        %905 = vmatpush.bf16.msra.mxu0 0
        %906 = vmatpush.bf16.msra.mxu0 0
        %907 = vmatpush.bf16.msra.mxu0 %v894
        %908 = vmatmul.bf16.gmra.mxu0 %v898
        %v909 = vpop.f32.mrf.mxu0
        %v910 = vadd.f32 %v887, %v909
        %v911 = vpop.f32.mrf.mxu0
        %912 = vdwg.mxu0
        %v913 = vperm.slane %v602, 0
        %v914 = vadd.f32 %v910, %v913
        %v915 = vmax.f32 %v914, 0.0
        %v916 = vpack.c.bf16 %v915, %v915
        %v917 = vld [vmem:[#allocation16] sm:$0xf]
        %v918 = vld [vmem:[#allocation16 + $0x4] sm:$0xf]
        %v919 = vld [vmem:[#allocation16 + $0x8] sm:$0xf]
        %v920 = vld [vmem:[#allocation16 + $0xc] sm:$0xf]
        %v921 = vld [vmem:[#allocation16 + $0x10] sm:$0xf]
        %v922 = vld [vmem:[#allocation16 + $0x14] sm:$0xf]
        %v923 = vld [vmem:[#allocation16 + $0x18] sm:$0xf]
        %v924 = vld [vmem:[#allocation16 + $0x1c] sm:$0xf]
        %v925 = vld [vmem:[#allocation16 + $0x20] sm:$0xf]
        %v926 = vld [vmem:[#allocation16 + $0x24] sm:$0xf]
        %v927 = vld [vmem:[#allocation16 + $0x28] sm:$0xf]
        %v928 = vld [vmem:[#allocation16 + $0x2c] sm:$0xf]
        %v929 = vld [vmem:[#allocation16 + $0x30] sm:$0xf]
        %v930 = vld [vmem:[#allocation16 + $0x34] sm:$0xf]
        %v931 = vld [vmem:[#allocation16 + $0x38] sm:$0xf]
        %v932 = vld [vmem:[#allocation16 + $0x3c] sm:$0xf]
        %v933 = vperm.slane %v603, 0
        %v950 = vunpack.c.l.b16 %v917
        %v951 = vunpack.c.l.b16 %v918
        %v952 = vunpack.c.l.b16 %v919
        %v953 = vunpack.c.l.b16 %v920
        %v954 = vunpack.c.l.b16 %v921
        %v955 = vunpack.c.l.b16 %v922
        %v956 = vunpack.c.l.b16 %v923
        %v957 = vunpack.c.l.b16 %v924
        %v958 = vunpack.c.l.b16 %v925
        %v959 = vunpack.c.l.b16 %v926
        %v960 = vunpack.c.l.b16 %v927
        %v961 = vunpack.c.l.b16 %v928
        %v962 = vunpack.c.l.b16 %v929
        %v963 = vunpack.c.l.b16 %v930
        %v964 = vunpack.c.l.b16 %v931
        %v965 = vunpack.c.l.b16 %v932
        %v966 = vpack.c.b16 %v951, %v950
        %v967 = vpack.c.b16 %v953, %v952
        %v968 = vpack.c.b16 %v955, %v954
        %v969 = vpack.c.b16 %v957, %v956
        %v970 = vpack.c.b16 %v959, %v958
        %v971 = vpack.c.b16 %v961, %v960
        %v972 = vpack.c.b16 %v963, %v962
        %v973 = vpack.c.b16 %v965, %v964
        %982 = vmatpush.bf16.msra.mxu0 %v973
        %983 = vmatpush.bf16.msra.mxu0 %v972
        %984 = vmatpush.bf16.msra.mxu0 %v971
        %985 = vmatpush.bf16.msra.mxu0 %v970
        %986 = vmatpush.bf16.msra.mxu0 %v969
        %987 = vmatpush.bf16.msra.mxu0 %v968
        %988 = vmatpush.bf16.msra.mxu0 %v967
        %989 = vmatpush.bf16.msra.mxu0 %v966
        %990 = vmatmul.bf16.gmra.mxu0 %v916
        %v991 = vpop.f32.mrf.mxu0
        %v992 = vadd.f32 %v933, %v991
        %v993 = vpop.f32.mrf.mxu0
        %994 = vdwg.mxu0
        %v995 = vmax.f32 %v992, 0.0
        %v996 = vpack.c.bf16 %v995, %v995
        %v997 = vld [vmem:[#allocation17] sm:$0xf]
        %v998 = vld [vmem:[#allocation17 + $0x4] sm:$0xf]
        %v999 = vld [vmem:[#allocation17 + $0x8] sm:$0xf]
        %v1000 = vld [vmem:[#allocation17 + $0xc] sm:$0xf]
        %v1001 = vld [vmem:[#allocation17 + $0x10] sm:$0xf]
        %v1002 = vld [vmem:[#allocation17 + $0x14] sm:$0xf]
        %v1003 = vld [vmem:[#allocation17 + $0x18] sm:$0xf]
        %v1004 = vld [vmem:[#allocation17 + $0x1c] sm:$0xf]
        %v1005 = vld [vmem:[#allocation17 + $0x20] sm:$0xf]
        %v1006 = vld [vmem:[#allocation17 + $0x24] sm:$0xf]
        %v1007 = vld [vmem:[#allocation17 + $0x28] sm:$0xf]
        %v1008 = vld [vmem:[#allocation17 + $0x2c] sm:$0xf]
        %v1009 = vld [vmem:[#allocation17 + $0x30] sm:$0xf]
        %v1010 = vld [vmem:[#allocation17 + $0x34] sm:$0xf]
        %v1011 = vld [vmem:[#allocation17 + $0x38] sm:$0xf]
        %v1012 = vld [vmem:[#allocation17 + $0x3c] sm:$0xf]
        %v1013 = vperm.slane %v604, 0
        %v1030 = vunpack.c.l.b16 %v997
        %v1031 = vunpack.c.l.b16 %v998
        %v1032 = vunpack.c.l.b16 %v999
        %v1033 = vunpack.c.l.b16 %v1000
        %v1034 = vunpack.c.l.b16 %v1001
        %v1035 = vunpack.c.l.b16 %v1002
        %v1036 = vunpack.c.l.b16 %v1003
        %v1037 = vunpack.c.l.b16 %v1004
        %v1038 = vunpack.c.l.b16 %v1005
        %v1039 = vunpack.c.l.b16 %v1006
        %v1040 = vunpack.c.l.b16 %v1007
        %v1041 = vunpack.c.l.b16 %v1008
        %v1042 = vunpack.c.l.b16 %v1009
        %v1043 = vunpack.c.l.b16 %v1010
        %v1044 = vunpack.c.l.b16 %v1011
        %v1045 = vunpack.c.l.b16 %v1012
        %v1046 = vpack.c.b16 %v1031, %v1030
        %v1047 = vpack.c.b16 %v1033, %v1032
        %v1048 = vpack.c.b16 %v1035, %v1034
        %v1049 = vpack.c.b16 %v1037, %v1036
        %v1050 = vpack.c.b16 %v1039, %v1038
        %v1051 = vpack.c.b16 %v1041, %v1040
        %v1052 = vpack.c.b16 %v1043, %v1042
        %v1053 = vpack.c.b16 %v1045, %v1044
        %1062 = vmatpush.bf16.msra.mxu0 %v1053
        %1063 = vmatpush.bf16.msra.mxu0 %v1052
        %1064 = vmatpush.bf16.msra.mxu0 %v1051
        %1065 = vmatpush.bf16.msra.mxu0 %v1050
        %1066 = vmatpush.bf16.msra.mxu0 %v1049
        %1067 = vmatpush.bf16.msra.mxu0 %v1048
        %1068 = vmatpush.bf16.msra.mxu0 %v1047
        %1069 = vmatpush.bf16.msra.mxu0 %v1046
        %1070 = vmatmul.bf16.gmra.mxu0 %v996
        %v1071 = vpop.f32.mrf.mxu0
        %v1072 = vadd.f32 %v1013, %v1071
        %v1073 = vpop.f32.mrf.mxu0
        %1074 = vdwg.mxu0
        %v1075 = vtanh.pop %v1072
        %1076 = vst [vmem:[%s594] sm:$0xff] %v1075
        %1077 = vst [vmem:[%s594 + $0x8] sm:$0xff] %v808
        %s1078 = sand.u32 %s289, 1
        %s1079 = scalar_lea.sflag [#allocation4], %s1078
        %s1080 = sand.u32 %s289, 1
        %s1081 = smul.addr %s1080, 16
        %s1082 = scalar_lea.vmem [#allocation19], %s1081
        // Predicated region
        $region105: #{tpu_custom_call.1} parent=63 // pred_check
          %p1083 = pneg %p299
        $region106: #{tpu_custom_call.1} parent=63 // pred_check_branch
          %1085 = sbr.rel (%p1083) target = $region108
        $region107: #{tpu_custom_call.1} parent=63 // pred_region
          %1087 = vsyncadd %s1079, 0
          %s1088 = smul.addr %s35, 2
          %s1089 = smul.addr %s1088, 8
          %s1090 = scalar_lea.hbm %s11, %s1089
          %s1092 = sshll.u32 %s1082, 4
          %s1093 = int_to_ptr.vmem [resolvable:$true] %s1092
          %s1094 = sshll.u32 %s1090, 4
          %s1095 = int_to_ptr.hbm [resolvable:$true] %s1094
          %1097 = dma.vmem_to_hbm [thread:$0]  %s1093, 256, %s1095, %s1079
        $region108: #{tpu_custom_call.1} parent=63 // pred_fallthru
          _
      $region64: #{tpu_custom_call.1} parent=5 // pred_fallthru
        _
      %p1098 = scmp.le.s32.totalorder 2, %s30
      // Predicated region
      $region109: #{tpu_custom_call.1} parent=5 // pred_check
        %p1099 = pneg %p1098
      $region110: #{tpu_custom_call.1} parent=5 // pred_check_branch
        %1101 = sbr.rel (%p1099) target = $region112
      $region111: #{tpu_custom_call.1} parent=5 // pred_region
        %s1102 = ssub.s32 %s30, 2
        // Predicated region
        $region113: #{tpu_custom_call.1} parent=111 // pred_check
          %p1103 = pneg %p305
        $region114: #{tpu_custom_call.1} parent=111 // pred_check_branch
          %1105 = sbr.rel (%p1103) target = $region116
        $region115: #{tpu_custom_call.1} parent=111 // pred_region
          %s1106 = sand.u32 %s290, 1
          %s1107 = scalar_lea.sflag [#allocation4], %s1106
          %s1108 = sand.u32 %s290, 1
          %s1109 = smul.addr %s1108, 16
          %s1110 = scalar_lea.vmem [#allocation19], %s1109
          %1112 = dma.done %s1107, 256
        $region116: #{tpu_custom_call.1} parent=111 // pred_fallthru
          _
      $region112: #{tpu_custom_call.1} parent=5 // pred_fallthru
        _
    $region6: #{tpu_custom_call.1} parent=1 // loop_footer
      %s34 = sadd.s32 1, %s30
    $region7: #{tpu_custom_call.1} parent=1 // loop_footer_branch
      %29 = sbr.rel target = $region3
    $region8: #{tpu_custom_call.1} parent=1 // loop_exit
      _
    %1113 = vsyncpa [#allocation3], 1
    %s1114 = scalar_lea.sflag [#allocation3], 1
    %1115 = vsyncpa %s1114, 1
    %1116 = vsyncpa [#allocation6], 1
    %s1117 = scalar_lea.sflag [#allocation6], 1
    %1118 = vsyncpa %s1117, 1
    %1119 = vsyncpa [#allocation9], 1
    %1120 = vsyncpa [#allocation12], 1
    %1121 = vsyncpa [#allocation15], 1
    %1122 = vsyncpa [#allocation18], 1
    %1123 = vsyncpa [#allocation4], 1
    %s1124 = scalar_lea.sflag [#allocation4], 1
    %1125 = vsyncpa %s1124, 1

</llo_original>
